<compile_context>
chip_gen: v7x
topology: tpu7x:2x2x1
jax: 0.10.0
libtpu: 0.0.40
codegen_flags: <defaults>
</compile_context>

<pallas_src>
import functools
import math

import jax
import jax.numpy as jnp
import numpy as np
from jax import lax
from jax.experimental import pallas as pl
from jax.experimental.pallas import tpu as pltpu


def resnet_block_kernel(x_ref, sel_ref, selts_ref, sup_ref, sdn_ref, m_ref,
                        bconv_ref, mpw_ref, bpw_ref, o_ref, *, eps, inv_sqrt_w):
    # x_ref    : (M, WC)     lane-dense slab, M = IMGS_PER_STEP*H rows, lane = w*C + c
    # sel_ref  : (WC, C)     W-sum selection matrix (RMS reduce)
    # selts_ref: (C, WC)     broadcast-back matrix with the timestep scale folded in
    # sup_ref  : (M, M)      block-diag "row h <- row h-1" shift (per-image zero halo)
    # sdn_ref  : (M, M)      block-diag "row h <- row h+1" shift (per-image zero halo)
    # m_ref    : (3, WC, WC) lane-space grouped-conv weights (one per H tap)
    # bconv_ref: (1, WC)     conv bias, group-major lane layout
    # mpw_ref  : (WC//2, WC) lane-space 1x1 pointwise weights
    # bpw_ref  : (1, WC)     pointwise bias, channel-interleaved lane layout
    # o_ref    : (M, WC)
    M, WC = x_ref.shape
    half_lanes = WC // 2

    x = x_ref[...]

    # --- RMSNorm over the W axis (lane-strided) via two small MXU matmuls ---
    ssum = jnp.dot(x * x, sel_ref[...], preferred_element_type=jnp.float32)    # (M, C)
    rms = jnp.sqrt(ssum) * inv_sqrt_w
    inv = pl.reciprocal(rms + eps, approx=False)                               # exact: 1e-4 check
    factor = jnp.dot(inv, selts_ref[...], preferred_element_type=jnp.float32)  # (M, WC)
    xn = x * factor                                                            # stays in vregs

    # --- +/-1 H-tap operands via tiny block-diagonal shift matmuls (no VMEM scratch,
    #     no sublane-misaligned reloads; per-image halos are exact by construction) ---
    xn_up = jnp.dot(sup_ref[...], xn, preferred_element_type=jnp.float32)      # row h = xn[h-1]
    xn_dn = jnp.dot(sdn_ref[...], xn, preferred_element_type=jnp.float32)      # row h = xn[h+1]

    # --- grouped 3x3 conv: 3 lane-space matmuls (all W taps + both groups folded in),
    #     kept as a single accumulation chain (MRB in-place accumulate on v7x) ---
    y = jnp.dot(xn_up, m_ref[0], preferred_element_type=jnp.float32)
    y += jnp.dot(xn, m_ref[1], preferred_element_type=jnp.float32)
    y += jnp.dot(xn_dn, m_ref[2], preferred_element_type=jnp.float32)
    y += bconv_ref[...]

    # --- pointwise gating: conv output is group-major -> contiguous 64-lane halves ---
    lin = y[:, :half_lanes]
    gate = y[:, half_lanes:]
    g = lin * jnp.sin(gate)                                                    # (M, WC/2)

    # --- 1x1 pointwise conv + residual (output lane layout matches the input slab) ---
    pw = jnp.dot(g, mpw_ref[...], preferred_element_type=jnp.float32) + bpw_ref[...]
    o_ref[...] = pw + x                                                        # reuse loaded x


def _lane_space_params(params, W, C):
    """Fold the grouped 3x3 conv (incl. its W 'same' padding and groups=2 structure),
    the 1x1 pointwise conv and both biases into lane-space (W*C-wide) operands."""
    f32 = jnp.float32
    half = C // 2
    WC = W * C

    w_conv = params["w_conv"].astype(f32)                        # (C, half, 3, 3) OIHW
    # A[kh, kw, g, i, o] = w_conv[g*half + o, i, kh, kw]
    A = jnp.transpose(w_conv.reshape(2, half, half, 3, 3), (3, 4, 0, 2, 1))

    taps = []
    for dh in range(3):
        group_blocks = []
        for g in range(2):
            blk = jnp.zeros((WC, W * half), f32)
            for dw in range(3):
                bg = jnp.zeros((C, half), f32).at[g * half:(g + 1) * half, :].set(A[dh, dw, g])
                # shift matrix: w_in = w_out + dw - 1 ('same' zero padding at the W edges)
                blk = blk + jnp.kron(jnp.eye(W, k=1 - dw, dtype=f32), bg)
            group_blocks.append(blk)
        taps.append(jnp.concatenate(group_blocks, axis=1))       # (WC, WC), group-major cols
    m = jnp.stack(taps)                                          # (3, WC, WC)

    # RMS reduce-over-W selection matrix: sel[w*C + c, c] = 1
    sel = jnp.kron(jnp.ones((W, 1), f32), jnp.eye(C, dtype=f32))                # (WC, C)

    # 1x1 pointwise conv in lane space: mpw[w*half + i, w*C + o] = w_pw[o, i]
    mpw = jnp.kron(jnp.eye(W, dtype=f32), params["w_pw"][:, :, 0, 0].astype(f32).T)

    b_conv = params["b_conv"].astype(f32)
    bconv_lane = jnp.concatenate(
        [jnp.tile(b_conv[:half], W), jnp.tile(b_conv[half:], W)]).reshape(1, WC)
    bpw_lane = jnp.tile(params["b_pw"].astype(f32), W).reshape(1, WC)
    return m, sel, mpw, bconv_lane, bpw_lane


def simple_resnet_block(x_nchw, t, params, *, eps=1e-8, imgs_per_step=2):
    """Pallas implementation of SimpleResNetBlock.forward (NCHW in / NCHW out)."""
    N, C, H, W = x_nchw.shape
    half = C // 2
    WC = W * C
    f32 = jnp.float32

    assert C % 2 == 0, "groups=2 / gating require an even channel count"
    assert WC == 128, "lane-dense design assumes W*C == 128 exactly"
    if N % imgs_per_step != 0:
        imgs_per_step = 1
    # TODO(synk): on single-TensorCore chips (v5e/v6e) set imgs_per_step=N (1 grid step).
    M_blk = imgs_per_step * H
    assert M_blk % 8 == 0, "stacked slab rows must be 8-sublane aligned"
    grid_steps = N // imgs_per_step

    # TimestepRMSNorm: scale = Linear(t_embed, C, bias=False)(t)  (tiny matvec, glue)
    scale = (params["w_ts"].astype(f32) @ t.astype(f32)).reshape(C)

    m, sel, mpw, bconv_lane, bpw_lane = _lane_space_params(params, W, C)
    # broadcast-back matrix with the per-channel timestep scale folded in:
    # selts[c, w*C + c] = scale[c]
    selts = scale[:, None] * jnp.transpose(sel)                  # (C, WC)

    # block-diagonal H-shift matrices over the images stacked in one grid step
    s_up = jnp.kron(jnp.eye(imgs_per_step, dtype=f32), jnp.eye(H, k=-1, dtype=f32))  # row h <- h-1
    s_dn = jnp.kron(jnp.eye(imgs_per_step, dtype=f32), jnp.eye(H, k=1, dtype=f32))   # row h <- h+1

    # lane-dense slabs: x_lane[n*H + h, w*C + c] = x[n, c, h, w]
    x_lane = jnp.transpose(x_nchw.astype(f32), (0, 2, 3, 1)).reshape(N * H, WC)

    kernel = functools.partial(resnet_block_kernel, eps=eps,
                               inv_sqrt_w=1.0 / math.sqrt(W))

    grid_spec = pltpu.PrefetchScalarGridSpec(
        num_scalar_prefetch=0,
        grid=(grid_steps,),
        in_specs=[
            pl.BlockSpec((M_blk, WC), lambda n: (n, 0)),          # x slab (pipelined)
            pl.BlockSpec((WC, C), lambda n: (0, 0)),              # sel        (constant block)
            pl.BlockSpec((C, WC), lambda n: (0, 0)),              # selts      (constant block)
            pl.BlockSpec((M_blk, M_blk), lambda n: (0, 0)),       # s_up       (constant block)
            pl.BlockSpec((M_blk, M_blk), lambda n: (0, 0)),       # s_dn       (constant block)
            pl.BlockSpec((3, WC, WC), lambda n: (0, 0, 0)),       # conv lane weights
            pl.BlockSpec((1, WC), lambda n: (0, 0)),              # conv bias
            pl.BlockSpec((W * half, WC), lambda n: (0, 0)),       # pointwise lane weights
            pl.BlockSpec((1, WC), lambda n: (0, 0)),              # pointwise bias
        ],
        out_specs=pl.BlockSpec((M_blk, WC), lambda n: (n, 0)),
    )

    # Advisory cost estimate so XLA schedules the surrounding relayouts around us.
    rows = N * H
    flops = (3 * 2 * rows * WC * WC            # 3 lane-space conv matmuls
             + 2 * 2 * rows * M_blk * WC       # 2 H-shift matmuls
             + 2 * rows * (W * half) * WC      # pointwise matmul
             + 2 * 2 * rows * WC * C           # RMS reduce + broadcast matmuls
             + 8 * rows * WC)                  # elementwise
    transcendentals = rows * (W * half) + 2 * rows * C
    bytes_accessed = 4 * (2 * rows * WC + 3 * WC * WC + 2 * WC * C
                          + W * half * WC + 2 * WC + 2 * M_blk * M_blk)

    out_lane = pl.pallas_call(
        kernel,
        out_shape=jax.ShapeDtypeStruct((N * H, WC), f32),
        grid_spec=grid_spec,
        compiler_params=pltpu.CompilerParams(
            dimension_semantics=("parallel",),   # 2 steps -> both TCs on v7x
        ),
        cost_estimate=pl.CostEstimate(flops=flops, transcendentals=transcendentals,
                                      bytes_accessed=bytes_accessed),
    )(x_lane, sel, selts, s_up, s_dn, m, bconv_lane, mpw, bpw_lane)

    return jnp.transpose(out_lane.reshape(N, H, W, C), (0, 3, 1, 2))


def reference_forward(x_nchw, t, params, *, eps=1e-8):
    """Pure-JAX (XLA) reference mirroring the PyTorch forward, NCHW throughout."""
    N, C, H, W = x_nchw.shape
    half = C // 2
    scale = params["w_ts"] @ t                                   # (C,)

    norm = jnp.sqrt(jnp.sum(x_nchw * x_nchw, axis=-1, keepdims=True))
    rms = norm / (W ** 0.5)
    xn = scale[None, :, None, None] * x_nchw / (rms + eps)

    y = lax.conv_general_dilated(
        xn, params["w_conv"], window_strides=(1, 1), padding="SAME",
        dimension_numbers=("NCHW", "OIHW", "NCHW"), feature_group_count=2)
    y = y + params["b_conv"][None, :, None, None]

    lin, gate = y[:, :half], y[:, half:]
    g = lin * jnp.sin(gate)

    pw = lax.conv_general_dilated(
        g, params["w_pw"], window_strides=(1, 1), padding="SAME",
        dimension_numbers=("NCHW", "OIHW", "NCHW"))
    pw = pw + params["b_pw"][None, :, None, None]
    return pw + x_nchw


if __name__ == "__main__":
    # Small shapes consistent with the module: in_channels == out_channels (skip),
    # channels even (groups=2 and gating), timestep_embed_size=1.
    # W*C = 128 makes the slabs exactly lane-dense; N=4 with 2 images/step -> 2 grid steps.
    N, C, H, W = 4, 8, 16, 16
    T_EMB = 1

    key = jax.random.PRNGKey(0)
    k_x, k_t, k_ts, k_wc, k_bc, k_wp, k_bp = jax.random.split(key, 7)

    x = jax.random.normal(k_x, (N, C, H, W), jnp.float32)        # NCHW, like torch
    t = jax.random.normal(k_t, (T_EMB,), jnp.float32)

    params = {
        # TimestepRMSNorm: nn.Linear(timestep_embed_size, out_channels, bias=False)
        "w_ts": jax.random.normal(k_ts, (C, T_EMB), jnp.float32) * 0.5,
        # nn.Conv2d(C, C, 3, groups=2): weight (C, C//2, 3, 3), bias (C,)
        "w_conv": jax.random.normal(k_wc, (C, C // 2, 3, 3), jnp.float32) * 0.1,
        "b_conv": jax.random.normal(k_bc, (C,), jnp.float32) * 0.1,
        # nn.Conv2d(C//2, C, 1): weight (C, C//2, 1, 1), bias (C,)
        # (the PyTorch module zero-inits these; nonzero here to exercise the kernel)
        "w_pw": jax.random.normal(k_wp, (C, C // 2, 1, 1), jnp.float32) * 0.1,
        "b_pw": jax.random.normal(k_bp, (C,), jnp.float32) * 0.1,
    }

    out = jax.block_until_ready(simple_resnet_block(x, t, params))
    ref = jax.block_until_ready(reference_forward(x, t, params))
    np.testing.assert_allclose(np.asarray(out), np.asarray(ref), rtol=1e-4, atol=1e-4)

    print("KERNEL_OK")
</pallas_src>

<mosaic_0001>
module attributes {stable_mosaic.version = 11 : i64} {
  func.func @resnet_block_kernel(%arg0: i32, %arg1: memref<32x128xf32, #tpu.memory_space<vmem>>, %arg2: memref<128x8xf32, #tpu.memory_space<vmem>>, %arg3: memref<8x128xf32, #tpu.memory_space<vmem>>, %arg4: memref<32x32xf32, #tpu.memory_space<vmem>>, %arg5: memref<32x32xf32, #tpu.memory_space<vmem>>, %arg6: memref<3x128x128xf32, #tpu.memory_space<vmem>>, %arg7: memref<1x128xf32, #tpu.memory_space<vmem>>, %arg8: memref<64x128xf32, #tpu.memory_space<vmem>>, %arg9: memref<1x128xf32, #tpu.memory_space<vmem>>, %arg10: memref<32x128xf32, #tpu.memory_space<vmem>>) attributes {dimension_semantics = [#tpu.dimension_semantics<parallel>], iteration_bounds = array<i64: 2>, scalar_prefetch = 0 : i64, scratch_operands = 0 : i64, tpu.core_type = #tpu.core_type<tc>, window_params = [{transform_indices = @transform_0, window_bounds = array<i64: 32, 128>}, {pipeline_mode = #tpu.pipeline_mode<synchronous>, transform_indices = @transform_1, window_bounds = array<i64: 128, 8>}, {pipeline_mode = #tpu.pipeline_mode<synchronous>, transform_indices = @transform_2, window_bounds = array<i64: 8, 128>}, {pipeline_mode = #tpu.pipeline_mode<synchronous>, transform_indices = @transform_3, window_bounds = array<i64: 32, 32>}, {pipeline_mode = #tpu.pipeline_mode<synchronous>, transform_indices = @transform_4, window_bounds = array<i64: 32, 32>}, {pipeline_mode = #tpu.pipeline_mode<synchronous>, transform_indices = @transform_5, window_bounds = array<i64: 3, 128, 128>}, {pipeline_mode = #tpu.pipeline_mode<synchronous>, transform_indices = @transform_6, window_bounds = array<i64: 1, 128>}, {pipeline_mode = #tpu.pipeline_mode<synchronous>, transform_indices = @transform_7, window_bounds = array<i64: 64, 128>}, {pipeline_mode = #tpu.pipeline_mode<synchronous>, transform_indices = @transform_8, window_bounds = array<i64: 1, 128>}, {transform_indices = @transform_9, window_bounds = array<i64: 32, 128>}]} {
    %c0 = arith.constant 0 : index
    %c0_0 = arith.constant 0 : index
    %0 = vector.load %arg1[%c0, %c0_0] : memref<32x128xf32, #tpu.memory_space<vmem>>, vector<32x128xf32>
    %1 = arith.mulf %0, %0 : vector<32x128xf32>
    %c0_1 = arith.constant 0 : index
    %c0_2 = arith.constant 0 : index
    %2 = vector.load %arg2[%c0_1, %c0_2] : memref<128x8xf32, #tpu.memory_space<vmem>>, vector<128x8xf32>
    %cst = arith.constant dense<0.000000e+00> : vector<32x8xf32>
    %3 = tpu.matmul %1, %2, %cst {dimension_numbers = #tpu.dot_dimension_numbers<[1], [0], [0], [1], [0, 0, 1, 1], [], []>} : vector<32x128xf32>, vector<128x8xf32>, vector<32x8xf32> -> vector<32x8xf32>
    %4 = math.sqrt %3 : vector<32x8xf32>
    %cst_3 = arith.constant 2.500000e-01 : f32
    %5 = vector.broadcast %cst_3 : f32 to vector<32x8xf32>
    %6 = arith.mulf %4, %5 : vector<32x8xf32>
    %cst_4 = arith.constant 9.99999993E-9 : f32
    %7 = vector.broadcast %cst_4 : f32 to vector<32x8xf32>
    %8 = arith.addf %6, %7 : vector<32x8xf32>
    %9 = tpu.reciprocal %8 : vector<32x8xf32> -> vector<32x8xf32>
    %c0_5 = arith.constant 0 : index
    %c0_6 = arith.constant 0 : index
    %10 = vector.load %arg3[%c0_5, %c0_6] : memref<8x128xf32, #tpu.memory_space<vmem>>, vector<8x128xf32>
    %cst_7 = arith.constant dense<0.000000e+00> : vector<32x128xf32>
    %11 = tpu.matmul %9, %10, %cst_7 {dimension_numbers = #tpu.dot_dimension_numbers<[1], [0], [0], [1], [0, 0, 1, 1], [], []>} : vector<32x8xf32>, vector<8x128xf32>, vector<32x128xf32> -> vector<32x128xf32>
    %12 = arith.mulf %0, %11 : vector<32x128xf32>
    %c0_8 = arith.constant 0 : index
    %c0_9 = arith.constant 0 : index
    %13 = vector.load %arg4[%c0_8, %c0_9] : memref<32x32xf32, #tpu.memory_space<vmem>>, vector<32x32xf32>
    %cst_10 = arith.constant dense<0.000000e+00> : vector<32x128xf32>
    %14 = tpu.matmul %13, %12, %cst_10 {dimension_numbers = #tpu.dot_dimension_numbers<[1], [0], [0], [1], [0, 0, 1, 1], [], []>} : vector<32x32xf32>, vector<32x128xf32>, vector<32x128xf32> -> vector<32x128xf32>
    %c0_11 = arith.constant 0 : index
    %c0_12 = arith.constant 0 : index
    %15 = vector.load %arg5[%c0_11, %c0_12] : memref<32x32xf32, #tpu.memory_space<vmem>>, vector<32x32xf32>
    %cst_13 = arith.constant dense<0.000000e+00> : vector<32x128xf32>
    %16 = tpu.matmul %15, %12, %cst_13 {dimension_numbers = #tpu.dot_dimension_numbers<[1], [0], [0], [1], [0, 0, 1, 1], [], []>} : vector<32x32xf32>, vector<32x128xf32>, vector<32x128xf32> -> vector<32x128xf32>
    %c0_14 = arith.constant 0 : index
    %c0_15 = arith.constant 0 : index
    %c0_16 = arith.constant 0 : index
    %17 = vector.load %arg6[%c0_14, %c0_15, %c0_16] : memref<3x128x128xf32, #tpu.memory_space<vmem>>, vector<1x128x128xf32>
    %18 = vector.shape_cast %17 : vector<1x128x128xf32> to vector<128x128xf32>
    %cst_17 = arith.constant dense<0.000000e+00> : vector<32x128xf32>
    %19 = tpu.matmul %14, %18, %cst_17 {dimension_numbers = #tpu.dot_dimension_numbers<[1], [0], [0], [1], [0, 0, 1, 1], [], []>} : vector<32x128xf32>, vector<128x128xf32>, vector<32x128xf32> -> vector<32x128xf32>
    %c1 = arith.constant 1 : index
    %c0_18 = arith.constant 0 : index
    %c0_19 = arith.constant 0 : index
    %20 = vector.load %arg6[%c1, %c0_18, %c0_19] : memref<3x128x128xf32, #tpu.memory_space<vmem>>, vector<1x128x128xf32>
    %21 = vector.shape_cast %20 : vector<1x128x128xf32> to vector<128x128xf32>
    %cst_20 = arith.constant dense<0.000000e+00> : vector<32x128xf32>
    %22 = tpu.matmul %12, %21, %cst_20 {dimension_numbers = #tpu.dot_dimension_numbers<[1], [0], [0], [1], [0, 0, 1, 1], [], []>} : vector<32x128xf32>, vector<128x128xf32>, vector<32x128xf32> -> vector<32x128xf32>
    %23 = arith.addf %19, %22 : vector<32x128xf32>
    %c2 = arith.constant 2 : index
    %c0_21 = arith.constant 0 : index
    %c0_22 = arith.constant 0 : index
    %24 = vector.load %arg6[%c2, %c0_21, %c0_22] : memref<3x128x128xf32, #tpu.memory_space<vmem>>, vector<1x128x128xf32>
    %25 = vector.shape_cast %24 : vector<1x128x128xf32> to vector<128x128xf32>
    %cst_23 = arith.constant dense<0.000000e+00> : vector<32x128xf32>
    %26 = tpu.matmul %16, %25, %cst_23 {dimension_numbers = #tpu.dot_dimension_numbers<[1], [0], [0], [1], [0, 0, 1, 1], [], []>} : vector<32x128xf32>, vector<128x128xf32>, vector<32x128xf32> -> vector<32x128xf32>
    %27 = arith.addf %23, %26 : vector<32x128xf32>
    %c0_24 = arith.constant 0 : index
    %c0_25 = arith.constant 0 : index
    %28 = vector.load %arg7[%c0_24, %c0_25] : memref<1x128xf32, #tpu.memory_space<vmem>>, vector<1x128xf32>
    %29 = vector.broadcast %28 : vector<1x128xf32> to vector<32x128xf32>
    %30 = arith.addf %27, %29 : vector<32x128xf32>
    %31 = vector.extract_strided_slice %30 {offsets = [0, 0], sizes = [32, 64], strides = [1, 1]} : vector<32x128xf32> to vector<32x64xf32>
    %32 = vector.extract_strided_slice %30 {offsets = [0, 64], sizes = [32, 64], strides = [1, 1]} : vector<32x128xf32> to vector<32x64xf32>
    %33 = math.sin %32 : vector<32x64xf32>
    %34 = arith.mulf %31, %33 : vector<32x64xf32>
    %c0_26 = arith.constant 0 : index
    %c0_27 = arith.constant 0 : index
    %35 = vector.load %arg8[%c0_26, %c0_27] : memref<64x128xf32, #tpu.memory_space<vmem>>, vector<64x128xf32>
    %cst_28 = arith.constant dense<0.000000e+00> : vector<32x128xf32>
    %36 = tpu.matmul %34, %35, %cst_28 {dimension_numbers = #tpu.dot_dimension_numbers<[1], [0], [0], [1], [0, 0, 1, 1], [], []>} : vector<32x64xf32>, vector<64x128xf32>, vector<32x128xf32> -> vector<32x128xf32>
    %c0_29 = arith.constant 0 : index
    %c0_30 = arith.constant 0 : index
    %37 = vector.load %arg9[%c0_29, %c0_30] : memref<1x128xf32, #tpu.memory_space<vmem>>, vector<1x128xf32>
    %38 = vector.broadcast %37 : vector<1x128xf32> to vector<32x128xf32>
    %39 = arith.addf %36, %38 : vector<32x128xf32>
    %40 = arith.addf %39, %0 : vector<32x128xf32>
    %c0_31 = arith.constant 0 : index
    %c0_32 = arith.constant 0 : index
    %41 = vector.load %arg10[%c0_31, %c0_32] : memref<32x128xf32, #tpu.memory_space<vmem>>, vector<32x128xf32>
    tpu.vector_store %arg10[%c0_31, %c0_32], %40 {strides = array<i32>} : memref<32x128xf32, #tpu.memory_space<vmem>>, vector<32x128xf32>,
    return
  }
  func.func @transform_0(%arg0: i32) -> (i32, i32) {
    %c0_i32 = arith.constant 0 : i32
    %c0_i32_0 = arith.constant 0 : i32
    return %arg0, %c0_i32 : i32, i32
  }
  func.func @transform_1(%arg0: i32) -> (i32, i32) {
    %c0_i32 = arith.constant 0 : i32
    %c0_i32_0 = arith.constant 0 : i32
    %c0_i32_1 = arith.constant 0 : i32
    return %c0_i32, %c0_i32_0 : i32, i32
  }
  func.func @transform_2(%arg0: i32) -> (i32, i32) {
    %c0_i32 = arith.constant 0 : i32
    %c0_i32_0 = arith.constant 0 : i32
    %c0_i32_1 = arith.constant 0 : i32
    return %c0_i32, %c0_i32_0 : i32, i32
  }
  func.func @transform_3(%arg0: i32) -> (i32, i32) {
    %c0_i32 = arith.constant 0 : i32
    %c0_i32_0 = arith.constant 0 : i32
    %c0_i32_1 = arith.constant 0 : i32
    return %c0_i32, %c0_i32_0 : i32, i32
  }
  func.func @transform_4(%arg0: i32) -> (i32, i32) {
    %c0_i32 = arith.constant 0 : i32
    %c0_i32_0 = arith.constant 0 : i32
    %c0_i32_1 = arith.constant 0 : i32
    return %c0_i32, %c0_i32_0 : i32, i32
  }
  func.func @transform_5(%arg0: i32) -> (i32, i32, i32) {
    %c0_i32 = arith.constant 0 : i32
    %c0_i32_0 = arith.constant 0 : i32
    %c0_i32_1 = arith.constant 0 : i32
    %c0_i32_2 = arith.constant 0 : i32
    return %c0_i32, %c0_i32_0, %c0_i32_1 : i32, i32, i32
  }
  func.func @transform_6(%arg0: i32) -> (i32, i32) {
    %c0_i32 = arith.constant 0 : i32
    %c0_i32_0 = arith.constant 0 : i32
    %c0_i32_1 = arith.constant 0 : i32
    return %c0_i32, %c0_i32_0 : i32, i32
  }
  func.func @transform_7(%arg0: i32) -> (i32, i32) {
    %c0_i32 = arith.constant 0 : i32
    %c0_i32_0 = arith.constant 0 : i32
    %c0_i32_1 = arith.constant 0 : i32
    return %c0_i32, %c0_i32_0 : i32, i32
  }
  func.func @transform_8(%arg0: i32) -> (i32, i32) {
    %c0_i32 = arith.constant 0 : i32
    %c0_i32_0 = arith.constant 0 : i32
    %c0_i32_1 = arith.constant 0 : i32
    return %c0_i32, %c0_i32_0 : i32, i32
  }
  func.func @transform_9(%arg0: i32) -> (i32, i32) {
    %c0_i32 = arith.constant 0 : i32
    %c0_i32_0 = arith.constant 0 : i32
    return %arg0, %c0_i32 : i32, i32
  }
}

</mosaic_0001>

<llo_original>
// kernel: tpu_custom_call.1
$region0: #{tpu_custom_call.1}
  #allocation0 [shape = 'u32[]', space=smem, size = 0x4, offset = 0x4, fixed_abs, tag = 'smem constant byte address 0x4 - core index']
  #allocation1 [shape = 'u32[144,128]{1,0:T(1,128)}', space=vmem, size = 0x12000, scoped, tag = 'internal scratch']
  %s0 = inlined_call_operand.vmem [shape: f32[64,128], index: 0, kind: input, shape index: {}]
  %s1 = inlined_call_operand.vmem [shape: f32[128,8], index: 1, kind: input, shape index: {}]
  %s2 = inlined_call_operand.vmem [shape: f32[8,128], index: 2, kind: input, shape index: {}]
  %s3 = inlined_call_operand.hbm [shape: f32[32,32], index: 3, kind: input, shape index: {}]
  %s4 = inlined_call_operand.hbm [shape: f32[32,32], index: 4, kind: input, shape index: {}]
  %s5 = inlined_call_operand.hbm [shape: f32[3,128,128], index: 5, kind: input, shape index: {}]
  %s6 = inlined_call_operand.vmem [shape: f32[1,128], index: 6, kind: input, shape index: {}]
  %s7 = inlined_call_operand.vmem [shape: f32[64,128], index: 7, kind: input, shape index: {}]
  %s8 = inlined_call_operand.vmem [shape: f32[1,128], index: 8, kind: input, shape index: {}]
  %s9 = inlined_call_operand.hbm [shape: f32[64,128], index: 9, kind: output, shape index: {}]
  %s10 = sld [smem:[#allocation0]]
  $region81: #{tpu_custom_call.1} parent=0
    _
  %s12 = ssub.s32 1, %s10
  %s13 = scalar_select 0, %s12, %s10
  $region1: #{tpu_custom_call.1} parent=0
    #allocation2 [shape = 'u8[16384]{0}', space=vmem, size = 0x4000, scoped, tag = 'input window, operand 3, single buffered']
    #allocation3 [shape = 's32[2]{0}', space=sflag, size = 0x8, scoped, tag = 'scoped memory for tpu_custom_call.1']
    #allocation4 [shape = 's32[2]{0}', space=sflag, size = 0x8, scoped, tag = 'scoped memory for tpu_custom_call.1']
    #allocation5 [shape = 'u8[16384]{0}', space=vmem, size = 0x4000, scoped, tag = 'input window, operand 4, single buffered']
    #allocation6 [shape = 's32[1]{0}', space=sflag, size = 0x4, scoped, tag = 'scoped memory for tpu_custom_call.1']
    #allocation7 [shape = 'u8[196608]{0}', space=vmem, size = 0x30000, scoped, tag = 'input window, operand 5, single buffered']
    #allocation8 [shape = 'u8[32768]{0}', space=vmem, size = 0x8000, scoped, tag = 'output window, operand 0']
    %14 = vsyncpa [#allocation3], 0
    %15 = vsyncpa [#allocation6], 0
    %16 = vsyncpa [#allocation4], 0
    %s17 = scalar_lea.sflag [#allocation4], 1
    %18 = vsyncpa %s17, 0
    loop: start=0, step=1, limit=4
    $region2: #{tpu_custom_call.1} parent=1 // loop_pre_header
      _
    $region3: #{tpu_custom_call.1} parent=1 // loop_header
      %s20 = sphi 0, %s24
      %p21 = scmp.ge.s32.totalorder %s20, 4
      %s30 = sphi 0, %s32
      %s33 = sphi 0, %s30
      %s34 = sphi 0, %s33
      %s50 = sphi 0, %s34
      %s54 = sphi 0, %s54
      %s56 = sphi 0, %s54
      %s57 = sphi 0, %s56
      %s71 = sphi 0, %s57
      %s75 = sphi 0, %s75
      %s77 = sphi 0, %s75
      %s78 = sphi 0, %s77
      %s92 = sphi 0, %s78
      %s96 = sphi 0, %s96
      %s98 = sphi 0, %s96
      %s99 = sphi 0, %s98
      %s113 = sphi 0, %s99
      %s117 = sphi 0, %s117
      %s119 = sphi 0, %s117
      %s120 = sphi 0, %s119
      %s134 = sphi 0, %s120
      %s138 = sphi 0, %s138
      %s140 = sphi 0, %s138
      %s141 = sphi 0, %s140
      %s155 = sphi 0, %s141
      %s159 = sphi 0, %s159
      %s161 = sphi 0, %s159
      %s162 = sphi 0, %s161
      %s176 = sphi 0, %s162
      %s180 = sphi 0, %s180
      %s182 = sphi 0, %s180
      %s183 = sphi 0, %s182
      %s197 = sphi 0, %s183
      %s201 = sphi 0, %s201
      %s203 = sphi 0, %s201
      %s204 = sphi 0, %s203
      %s218 = sphi 0, %s204
      %s224 = sphi 0, %s226
      %s227 = sphi 0, %s224
      %s228 = sphi 0, %s227
      %s244 = sphi 0, %s228
    $region4: #{tpu_custom_call.1} parent=1 // loop_header_branch
      %23 = sbr.rel (%p21) target = $region8
    $region5: #{tpu_custom_call.1} parent=1 // loop_body
      %s25 = ssub.s32 %s20, 1
      %s26 = ssub.s32 %s20, 2
      %s27 = sadd.s32 %s20, 1
      %s28 = ssub.s32 %s20, %s27
      %p29 = scmp.eq.s32.totalorder %s28, 0
      %s31 = sadd.s32 %s30, 1
      %s32 = scalar_select %p29, %s30, %s31
      %p35 = pneg %p29
      %p36 = scmp.eq.s32.totalorder %s20, 1
      %p37 = por %p35, %p36
      %p38 = scmp.ne.s32.totalorder %s30, %s33
      %p39 = scmp.eq.s32.totalorder %s20, 0
      %p40 = por %p38, %p39
      %p41 = scmp.ne.s32.totalorder %s30, %s33
      %p42 = scmp.eq.s32.totalorder %s25, 1
      %p43 = por %p41, %p42
      %p44 = scmp.ne.s32.totalorder %s33, %s34
      %p45 = scmp.eq.s32.totalorder %s25, 0
      %p46 = por %p44, %p45
      %p47 = scmp.ne.s32.totalorder %s33, %s34
      %p48 = scmp.eq.s32.totalorder %s26, 1
      %p49 = por %p47, %p48
      %p51 = scmp.ne.s32.totalorder %s34, %s50
      %p52 = scmp.eq.s32.totalorder %s26, 0
      %p53 = por %p51, %p52
      %s55 = sadd.s32 %s54, 1
      %p58 = scmp.eq.s32.totalorder %s20, 1
      %p59 = scmp.ne.s32.totalorder %s54, %s56
      %p60 = scmp.eq.s32.totalorder %s20, 0
      %p61 = por %p59, %p60
      %p62 = scmp.ne.s32.totalorder %s54, %s56
      %p63 = scmp.eq.s32.totalorder %s25, 1
      %p64 = por %p62, %p63
      %p65 = scmp.ne.s32.totalorder %s56, %s57
      %p66 = scmp.eq.s32.totalorder %s25, 0
      %p67 = por %p65, %p66
      %p68 = scmp.ne.s32.totalorder %s56, %s57
      %p69 = scmp.eq.s32.totalorder %s26, 1
      %p70 = por %p68, %p69
      %p72 = scmp.ne.s32.totalorder %s57, %s71
      %p73 = scmp.eq.s32.totalorder %s26, 0
      %p74 = por %p72, %p73
      %s76 = sadd.s32 %s75, 1
      %p79 = scmp.eq.s32.totalorder %s20, 1
      %p80 = scmp.ne.s32.totalorder %s75, %s77
      %p81 = scmp.eq.s32.totalorder %s20, 0
      %p82 = por %p80, %p81
      %p83 = scmp.ne.s32.totalorder %s75, %s77
      %p84 = scmp.eq.s32.totalorder %s25, 1
      %p85 = por %p83, %p84
      %p86 = scmp.ne.s32.totalorder %s77, %s78
      %p87 = scmp.eq.s32.totalorder %s25, 0
      %p88 = por %p86, %p87
      %p89 = scmp.ne.s32.totalorder %s77, %s78
      %p90 = scmp.eq.s32.totalorder %s26, 1
      %p91 = por %p89, %p90
      %p93 = scmp.ne.s32.totalorder %s78, %s92
      %p94 = scmp.eq.s32.totalorder %s26, 0
      %p95 = por %p93, %p94
      %s97 = sadd.s32 %s96, 1
      %p100 = scmp.eq.s32.totalorder %s20, 1
      %p101 = scmp.ne.s32.totalorder %s96, %s98
      %p102 = scmp.eq.s32.totalorder %s20, 0
      %p103 = por %p101, %p102
      %p104 = scmp.ne.s32.totalorder %s96, %s98
      %p105 = scmp.eq.s32.totalorder %s25, 1
      %p106 = por %p104, %p105
      %p107 = scmp.ne.s32.totalorder %s98, %s99
      %p108 = scmp.eq.s32.totalorder %s25, 0
      %p109 = por %p107, %p108
      %p110 = scmp.ne.s32.totalorder %s98, %s99
      %p111 = scmp.eq.s32.totalorder %s26, 1
      %p112 = por %p110, %p111
      %p114 = scmp.ne.s32.totalorder %s99, %s113
      %p115 = scmp.eq.s32.totalorder %s26, 0
      %p116 = por %p114, %p115
      %s118 = sadd.s32 %s117, 1
      %p121 = scmp.eq.s32.totalorder %s20, 1
      %p122 = scmp.ne.s32.totalorder %s117, %s119
      %p123 = scmp.eq.s32.totalorder %s20, 0
      %p124 = por %p122, %p123
      %p125 = scmp.ne.s32.totalorder %s117, %s119
      %p126 = scmp.eq.s32.totalorder %s25, 1
      %p127 = por %p125, %p126
      %p128 = scmp.ne.s32.totalorder %s119, %s120
      %p129 = scmp.eq.s32.totalorder %s25, 0
      %p130 = por %p128, %p129
      %p131 = scmp.ne.s32.totalorder %s119, %s120
      %p132 = scmp.eq.s32.totalorder %s26, 1
      %p133 = por %p131, %p132
      %p135 = scmp.ne.s32.totalorder %s120, %s134
      %p136 = scmp.eq.s32.totalorder %s26, 0
      %p137 = por %p135, %p136
      %s139 = sadd.s32 %s138, 1
      %p142 = scmp.eq.s32.totalorder %s20, 1
      %p143 = scmp.ne.s32.totalorder %s138, %s140
      %p144 = scmp.eq.s32.totalorder %s20, 0
      %p145 = por %p143, %p144
      %p146 = scmp.ne.s32.totalorder %s138, %s140
      %p147 = scmp.eq.s32.totalorder %s25, 1
      %p148 = por %p146, %p147
      %p149 = scmp.ne.s32.totalorder %s140, %s141
      %p150 = scmp.eq.s32.totalorder %s25, 0
      %p151 = por %p149, %p150
      %p152 = scmp.ne.s32.totalorder %s140, %s141
      %p153 = scmp.eq.s32.totalorder %s26, 1
      %p154 = por %p152, %p153
      %p156 = scmp.ne.s32.totalorder %s141, %s155
      %p157 = scmp.eq.s32.totalorder %s26, 0
      %p158 = por %p156, %p157
      %s160 = sadd.s32 %s159, 1
      %p163 = scmp.eq.s32.totalorder %s20, 1
      %p164 = scmp.ne.s32.totalorder %s159, %s161
      %p165 = scmp.eq.s32.totalorder %s20, 0
      %p166 = por %p164, %p165
      %p167 = scmp.ne.s32.totalorder %s159, %s161
      %p168 = scmp.eq.s32.totalorder %s25, 1
      %p169 = por %p167, %p168
      %p170 = scmp.ne.s32.totalorder %s161, %s162
      %p171 = scmp.eq.s32.totalorder %s25, 0
      %p172 = por %p170, %p171
      %p173 = scmp.ne.s32.totalorder %s161, %s162
      %p174 = scmp.eq.s32.totalorder %s26, 1
      %p175 = por %p173, %p174
      %p177 = scmp.ne.s32.totalorder %s162, %s176
      %p178 = scmp.eq.s32.totalorder %s26, 0
      %p179 = por %p177, %p178
      %s181 = sadd.s32 %s180, 1
      %p184 = scmp.eq.s32.totalorder %s20, 1
      %p185 = scmp.ne.s32.totalorder %s180, %s182
      %p186 = scmp.eq.s32.totalorder %s20, 0
      %p187 = por %p185, %p186
      %p188 = scmp.ne.s32.totalorder %s180, %s182
      %p189 = scmp.eq.s32.totalorder %s25, 1
      %p190 = por %p188, %p189
      %p191 = scmp.ne.s32.totalorder %s182, %s183
      %p192 = scmp.eq.s32.totalorder %s25, 0
      %p193 = por %p191, %p192
      %p194 = scmp.ne.s32.totalorder %s182, %s183
      %p195 = scmp.eq.s32.totalorder %s26, 1
      %p196 = por %p194, %p195
      %p198 = scmp.ne.s32.totalorder %s183, %s197
      %p199 = scmp.eq.s32.totalorder %s26, 0
      %p200 = por %p198, %p199
      %s202 = sadd.s32 %s201, 1
      %p205 = scmp.eq.s32.totalorder %s20, 1
      %p206 = scmp.ne.s32.totalorder %s201, %s203
      %p207 = scmp.eq.s32.totalorder %s20, 0
      %p208 = por %p206, %p207
      %p209 = scmp.ne.s32.totalorder %s201, %s203
      %p210 = scmp.eq.s32.totalorder %s25, 1
      %p211 = por %p209, %p210
      %p212 = scmp.ne.s32.totalorder %s203, %s204
      %p213 = scmp.eq.s32.totalorder %s25, 0
      %p214 = por %p212, %p213
      %p215 = scmp.ne.s32.totalorder %s203, %s204
      %p216 = scmp.eq.s32.totalorder %s26, 1
      %p217 = por %p215, %p216
      %p219 = scmp.ne.s32.totalorder %s204, %s218
      %p220 = scmp.eq.s32.totalorder %s26, 0
      %p221 = por %p219, %p220
      %s222 = ssub.s32 %s20, %s27
      %p223 = scmp.eq.s32.totalorder %s222, 0
      %s225 = sadd.s32 %s224, 1
      %s226 = scalar_select %p223, %s224, %s225
      %p229 = pneg %p223
      %p230 = scmp.eq.s32.totalorder %s20, 1
      %p231 = por %p229, %p230
      %p232 = scmp.ne.s32.totalorder %s224, %s227
      %p233 = scmp.eq.s32.totalorder %s20, 0
      %p234 = por %p232, %p233
      %p235 = scmp.ne.s32.totalorder %s224, %s227
      %p236 = scmp.eq.s32.totalorder %s25, 1
      %p237 = por %p235, %p236
      %p238 = scmp.ne.s32.totalorder %s227, %s228
      %p239 = scmp.eq.s32.totalorder %s25, 0
      %p240 = por %p238, %p239
      %p241 = scmp.ne.s32.totalorder %s227, %s228
      %p242 = scmp.eq.s32.totalorder %s26, 1
      %p243 = por %p241, %p242
      %p245 = scmp.ne.s32.totalorder %s228, %s244
      %p246 = scmp.eq.s32.totalorder %s26, 0
      %p247 = por %p245, %p246
      %p248 = scmp.le.s32.totalorder 1, %s20
      %p249 = scmp.lt.s32.totalorder %s20, 3
      %p250 = pnand %p248, %p249
      %p251 = pneg %p250
      // Predicated region
      $region9: #{tpu_custom_call.1} parent=5 // pred_check
        _
      $region10: #{tpu_custom_call.1} parent=5 // pred_check_branch
        %253 = sbr.rel (%p250) target = $region12
      $region11: #{tpu_custom_call.1} parent=5 // pred_region
        %s254 = ssub.s32 %s20, 1
        // Predicated region
        $region13: #{tpu_custom_call.1} parent=11 // pred_check
          %p255 = pneg %p67
        $region14: #{tpu_custom_call.1} parent=11 // pred_check_branch
          %257 = sbr.rel (%p255) target = $region16
        $region15: #{tpu_custom_call.1} parent=11 // pred_region
          _
        $region16: #{tpu_custom_call.1} parent=11 // pred_fallthru
          _
        // Predicated region
        $region17: #{tpu_custom_call.1} parent=11 // pred_check
          %p258 = pneg %p88
        $region18: #{tpu_custom_call.1} parent=11 // pred_check_branch
          %260 = sbr.rel (%p258) target = $region20
        $region19: #{tpu_custom_call.1} parent=11 // pred_region
          _
        $region20: #{tpu_custom_call.1} parent=11 // pred_fallthru
          _
        // Predicated region
        $region21: #{tpu_custom_call.1} parent=11 // pred_check
          %p261 = pneg %p109
        $region22: #{tpu_custom_call.1} parent=11 // pred_check_branch
          %263 = sbr.rel (%p261) target = $region24
        $region23: #{tpu_custom_call.1} parent=11 // pred_region
          %s265 = ssub.s32 512, 512
          %266 = vsyncadd [#allocation3], %s265
          %s267 = sshll.u32 [#allocation2], 4
          %s268 = int_to_ptr.vmem [resolvable:$true] %s267
          %273 = dma.hbm_to_vmem [thread:$0]  %s3, 512, %s268, [#allocation3], 128, 128, 8
        $region24: #{tpu_custom_call.1} parent=11 // pred_fallthru
          _
        // Predicated region
        $region25: #{tpu_custom_call.1} parent=11 // pred_check
          %p274 = pneg %p130
        $region26: #{tpu_custom_call.1} parent=11 // pred_check_branch
          %276 = sbr.rel (%p274) target = $region28
        $region27: #{tpu_custom_call.1} parent=11 // pred_region
          %s278 = ssub.s32 512, 512
          %279 = vsyncadd [#allocation6], %s278
          %s280 = sshll.u32 [#allocation5], 4
          %s281 = int_to_ptr.vmem [resolvable:$true] %s280
          %286 = dma.hbm_to_vmem [thread:$0]  %s4, 512, %s281, [#allocation6], 128, 128, 8
        $region28: #{tpu_custom_call.1} parent=11 // pred_fallthru
          _
        // Predicated region
        $region29: #{tpu_custom_call.1} parent=11 // pred_check
          %p287 = pneg %p151
        $region30: #{tpu_custom_call.1} parent=11 // pred_check_branch
          %289 = sbr.rel (%p287) target = $region32
        $region31: #{tpu_custom_call.1} parent=11 // pred_region
          %s291 = ssub.s32 6144, 6144
          %292 = vsyncadd [#allocation6], %s291
          %s293 = sshll.u32 [#allocation7], 4
          %s294 = int_to_ptr.vmem [resolvable:$true] %s293
          %299 = dma.hbm_to_vmem [thread:$0]  %s5, 6144, %s294, [#allocation6], 128, 128, 8
        $region32: #{tpu_custom_call.1} parent=11 // pred_fallthru
          _
        // Predicated region
        $region33: #{tpu_custom_call.1} parent=11 // pred_check
          %p300 = pneg %p172
        $region34: #{tpu_custom_call.1} parent=11 // pred_check_branch
          %302 = sbr.rel (%p300) target = $region36
        $region35: #{tpu_custom_call.1} parent=11 // pred_region
          _
        $region36: #{tpu_custom_call.1} parent=11 // pred_fallthru
          _
        // Predicated region
        $region37: #{tpu_custom_call.1} parent=11 // pred_check
          %p303 = pneg %p193
        $region38: #{tpu_custom_call.1} parent=11 // pred_check_branch
          %305 = sbr.rel (%p303) target = $region40
        $region39: #{tpu_custom_call.1} parent=11 // pred_region
          _
        $region40: #{tpu_custom_call.1} parent=11 // pred_fallthru
          _
        // Predicated region
        $region41: #{tpu_custom_call.1} parent=11 // pred_check
          %p306 = pneg %p214
        $region42: #{tpu_custom_call.1} parent=11 // pred_check_branch
          %308 = sbr.rel (%p306) target = $region44
        $region43: #{tpu_custom_call.1} parent=11 // pred_region
          _
        $region44: #{tpu_custom_call.1} parent=11 // pred_fallthru
          _
      $region12: #{tpu_custom_call.1} parent=5 // pred_fallthru
        _
      %p309 = scmp.lt.s32.totalorder %s20, 2
      // Predicated region
      $region45: #{tpu_custom_call.1} parent=5 // pred_check
        %p310 = pneg %p309
      $region46: #{tpu_custom_call.1} parent=5 // pred_check_branch
        %312 = sbr.rel (%p310) target = $region48
      $region47: #{tpu_custom_call.1} parent=5 // pred_region
        // Predicated region
        $region49: #{tpu_custom_call.1} parent=47 // pred_check
          %p313 = pneg %p40
        $region50: #{tpu_custom_call.1} parent=47 // pred_check_branch
          %315 = sbr.rel (%p313) target = $region52
        $region51: #{tpu_custom_call.1} parent=47 // pred_region
          %s316 = smul.u32 4, %s20
          %p317 = scmp.lt.s32.totalorder %s316, 7
          %s318 = scalar_select %p317, %s316, 7
          %s319 = smul.addr %s318, 8
          %s320 = scalar_lea.vmem %s0, %s319
          %s321 = smul.u32 4, %s20
        $region52: #{tpu_custom_call.1} parent=47 // pred_fallthru
          _
      $region48: #{tpu_custom_call.1} parent=5 // pred_fallthru
        _
      %p322 = scmp.le.s32.totalorder 1, %s20
      %p323 = scmp.lt.s32.totalorder %s20, 3
      %p324 = pnand %p322, %p323
      %p325 = pneg %p324
      // Predicated region
      $region53: #{tpu_custom_call.1} parent=5 // pred_check
        _
      $region54: #{tpu_custom_call.1} parent=5 // pred_check_branch
        %327 = sbr.rel (%p324) target = $region56
      $region55: #{tpu_custom_call.1} parent=5 // pred_region
        %s328 = ssub.s32 %s20, 1
        // Predicated region
        $region57: #{tpu_custom_call.1} parent=55 // pred_check
          %p329 = pneg %p109
        $region58: #{tpu_custom_call.1} parent=55 // pred_check_branch
          %331 = sbr.rel (%p329) target = $region60
        $region59: #{tpu_custom_call.1} parent=55 // pred_region
          %332 = dma.done [#allocation3], 512
        $region60: #{tpu_custom_call.1} parent=55 // pred_fallthru
          _
        // Predicated region
        $region61: #{tpu_custom_call.1} parent=55 // pred_check
          %p333 = pneg %p130
        $region62: #{tpu_custom_call.1} parent=55 // pred_check_branch
          %335 = sbr.rel (%p333) target = $region64
        $region63: #{tpu_custom_call.1} parent=55 // pred_region
          %336 = dma.done [#allocation6], 512
        $region64: #{tpu_custom_call.1} parent=55 // pred_fallthru
          _
        // Predicated region
        $region65: #{tpu_custom_call.1} parent=55 // pred_check
          %p337 = pneg %p151
        $region66: #{tpu_custom_call.1} parent=55 // pred_check_branch
          %339 = sbr.rel (%p337) target = $region68
        $region67: #{tpu_custom_call.1} parent=55 // pred_region
          %340 = dma.done [#allocation6], 6144
        $region68: #{tpu_custom_call.1} parent=55 // pred_fallthru
          _
        %s341 = smul.u32 4, %s25
        %p342 = scmp.lt.s32.totalorder %s341, 7
        %s343 = scalar_select %p342, %s341, 7
        %s344 = smul.addr %s343, 8
        %s345 = scalar_lea.vmem %s0, %s344
        %p346 = pneg %p46
        %p347 = pneg %p43
        %p348 = pneg %p67
        %p349 = pneg %p64
        %p350 = pneg %p88
        %p351 = pneg %p85
        %p352 = pneg %p109
        %p353 = pneg %p106
        %p354 = pneg %p130
        %p355 = pneg %p127
        %p356 = pneg %p151
        %p357 = pneg %p148
        %p358 = pneg %p172
        %p359 = pneg %p169
        %p360 = pneg %p193
        %p361 = pneg %p190
        %p362 = pneg %p214
        %p363 = pneg %p211
        %p364 = pneg %p240
        %p365 = pneg %p237
        %s366 = sand.u32 %s227, 1
        %s367 = scalar_lea.sflag [#allocation4], %s366
        %s368 = sand.u32 %s227, 1
        %s369 = smul.addr %s368, 32
        %s370 = scalar_lea.vmem [#allocation8], %s369
        %s371 = smul.u32 4, %s25
        %p372 = scmp.lt.s32.totalorder %s371, 7
        %s373 = scalar_select %p372, %s371, 7
        %s374 = smul.addr %s373, 8
        %s375 = scalar_lea.vmem %s0, %s374
        %s376 = smul.u32 4, %s25
        %s377 = smul.u32 4, %s25
        %v378 = vld [vmem:[%s375] sm:$0xff]
        %v379 = vld [vmem:[%s375 + $0x8] sm:$0xff]
        %v380 = vld [vmem:[%s375 + $0x10] sm:$0xff]
        %v381 = vld [vmem:[%s375 + $0x18] sm:$0xff]
        %v382 = vmul.f32 %v378, %v378
        %v383 = vmul.f32 %v379, %v379
        %v384 = vmul.f32 %v380, %v380
        %v385 = vmul.f32 %v381, %v381
        %v386 = vld [vmem:[%s1] sm:$0xff]
        %v387 = vld [vmem:[%s1 + $0x8] sm:$0xff]
        %v388 = vld [vmem:[%s1 + $0x10] sm:$0xff]
        %v389 = vld [vmem:[%s1 + $0x18] sm:$0xff]
        %v390 = vld [vmem:[%s1 + $0x20] sm:$0xff]
        %v391 = vld [vmem:[%s1 + $0x28] sm:$0xff]
        %v392 = vld [vmem:[%s1 + $0x30] sm:$0xff]
        %v393 = vld [vmem:[%s1 + $0x38] sm:$0xff]
        %v394 = vld [vmem:[%s1 + $0x40] sm:$0xff]
        %v395 = vld [vmem:[%s1 + $0x48] sm:$0xff]
        %v396 = vld [vmem:[%s1 + $0x50] sm:$0xff]
        %v397 = vld [vmem:[%s1 + $0x58] sm:$0xff]
        %v398 = vld [vmem:[%s1 + $0x60] sm:$0xff]
        %v399 = vld [vmem:[%s1 + $0x68] sm:$0xff]
        %v400 = vld [vmem:[%s1 + $0x70] sm:$0xff]
        %v401 = vld [vmem:[%s1 + $0x78] sm:$0xff]
        %402 = vmatprep.subr.mxu0 0.0
        %403 = vmatpush1.msra.mxu0 %v386
        %404 = vmatprep.subr.mxu0 0.0
        %405 = vmatpush1.msra.mxu0 %v387
        %406 = vmatprep.subr.mxu0 0.0
        %407 = vmatpush1.msra.mxu0 %v388
        %408 = vmatprep.subr.mxu0 0.0
        %409 = vmatpush1.msra.mxu0 %v389
        %410 = vmatprep.subr.mxu0 0.0
        %411 = vmatpush1.msra.mxu0 %v390
        %412 = vmatprep.subr.mxu0 0.0
        %413 = vmatpush1.msra.mxu0 %v391
        %414 = vmatprep.subr.mxu0 0.0
        %415 = vmatpush1.msra.mxu0 %v392
        %416 = vmatprep.subr.mxu0 0.0
        %417 = vmatpush1.msra.mxu0 %v393
        %418 = vmatprep.subr.mxu0 0.0
        %419 = vmatpush1.msra.mxu0 %v394
        %420 = vmatprep.subr.mxu0 0.0
        %421 = vmatpush1.msra.mxu0 %v395
        %422 = vmatprep.subr.mxu0 0.0
        %423 = vmatpush1.msra.mxu0 %v396
        %424 = vmatprep.subr.mxu0 0.0
        %425 = vmatpush1.msra.mxu0 %v397
        %426 = vmatprep.subr.mxu0 0.0
        %427 = vmatpush1.msra.mxu0 %v398
        %428 = vmatprep.subr.mxu0 0.0
        %429 = vmatpush1.msra.mxu0 %v399
        %430 = vmatprep.subr.mxu0 0.0
        %431 = vmatpush1.msra.mxu0 %v400
        %432 = vmatprep.subr.mxu0 0.0
        %433 = vmatpush1.msra.mxu0 %v401
        %434 = vmatprep.subr.mxu0 0.0
        %435 = vmatpush1.msra.mxu0 0.0
        %436 = vmatprep.subr.mxu0 0.0
        %437 = vmatpush1.msra.mxu0 0.0
        %438 = vmatprep.subr.mxu0 0.0
        %439 = vmatpush1.msra.mxu0 0.0
        %440 = vmatprep.subr.mxu0 0.0
        %441 = vmatpush1.msra.mxu0 0.0
        %442 = vmatprep.subr.mxu0 0.0
        %443 = vmatpush1.msra.mxu0 0.0
        %444 = vmatprep.subr.mxu0 0.0
        %445 = vmatpush1.msra.mxu0 0.0
        %446 = vmatprep.subr.mxu0 0.0
        %447 = vmatpush1.msra.mxu0 0.0
        %448 = vmatprep.subr.mxu0 0.0
        %449 = vmatpush1.msra.mxu0 0.0
        %450 = vmatprep.subr.mxu0 0.0
        %451 = vmatpush1.msra.mxu0 0.0
        %452 = vmatprep.subr.mxu0 0.0
        %453 = vmatpush1.msra.mxu0 0.0
        %454 = vmatprep.subr.mxu0 0.0
        %455 = vmatpush1.msra.mxu0 0.0
        %456 = vmatprep.subr.mxu0 0.0
        %457 = vmatpush1.msra.mxu0 0.0
        %458 = vmatprep.subr.mxu0 0.0
        %459 = vmatpush1.msra.mxu0 0.0
        %460 = vmatprep.subr.mxu0 0.0
        %461 = vmatpush1.msra.mxu0 0.0
        %462 = vmatprep.subr.mxu0 0.0
        %463 = vmatpush1.msra.mxu0 0.0
        %464 = vmatprep.subr.mxu0 0.0
        %465 = vmatpush1.msra.mxu0 0.0
        %466 = vmatprep.mubr.f32.mxu0 0.0
        %467 = vmatmul.mubr.f32.gmra.mrb[0].mxu0 %v382
        %v468 = vpop.f32.mrb[0].mxu0
        %v469 = vadd.f32 0.0, %v468
        %v470 = vpop.f32.mrb[0].mxu0
        %471 = vmatprep.mubr.f32.mxu0 0.0
        %472 = vmatmul.mubr.f32.gmra.mrb[0].mxu0 %v383
        %v473 = vpop.f32.mrb[0].mxu0
        %v474 = vadd.f32 0.0, %v473
        %v475 = vpop.f32.mrb[0].mxu0
        %476 = vmatprep.mubr.f32.mxu0 0.0
        %477 = vmatmul.mubr.f32.gmra.mrb[0].mxu0 %v384
        %v478 = vpop.f32.mrb[0].mxu0
        %v479 = vadd.f32 0.0, %v478
        %v480 = vpop.f32.mrb[0].mxu0
        %481 = vmatprep.mubr.f32.mxu0 0.0
        %482 = vmatmul.mubr.f32.gmra.mrb[0].mxu0 %v385
        %v483 = vpop.f32.mrb[0].mxu0
        %v484 = vadd.f32 0.0, %v483
        %v485 = vpop.f32.mrb[0].mxu0
        %486 = vdwg.mxu0
        %v487 = vrsqrt.pop %v469
        %v488 = vmul.f32 %v469, %v487
        %vm489 = vcmp.eq.f32.partialorder %v469, inf
        %v490 = vsel %vm489, %v469, %v488
        %vm491 = vcmp.eq.f32.partialorder %v469, 0.0
        %v492 = vand.u32 %v469, 2147483648
        %v493 = vsel %vm491, %v492, %v490
        %v494 = vrsqrt.pop %v474
        %v495 = vmul.f32 %v474, %v494
        %vm496 = vcmp.eq.f32.partialorder %v474, inf
        %v497 = vsel %vm496, %v474, %v495
        %vm498 = vcmp.eq.f32.partialorder %v474, 0.0
        %v499 = vand.u32 %v474, 2147483648
        %v500 = vsel %vm498, %v499, %v497
        %v501 = vrsqrt.pop %v479
        %v502 = vmul.f32 %v479, %v501
        %vm503 = vcmp.eq.f32.partialorder %v479, inf
        %v504 = vsel %vm503, %v479, %v502
        %vm505 = vcmp.eq.f32.partialorder %v479, 0.0
        %v506 = vand.u32 %v479, 2147483648
        %v507 = vsel %vm505, %v506, %v504
        %v508 = vrsqrt.pop %v484
        %v509 = vmul.f32 %v484, %v508
        %vm510 = vcmp.eq.f32.partialorder %v484, inf
        %v511 = vsel %vm510, %v484, %v509
        %vm512 = vcmp.eq.f32.partialorder %v484, 0.0
        %v513 = vand.u32 %v484, 2147483648
        %v514 = vsel %vm512, %v513, %v511
        %v515 = vmul.f32 %v493, 0.25
        %v516 = vmul.f32 %v500, 0.25
        %v517 = vmul.f32 %v507, 0.25
        %v518 = vmul.f32 %v514, 0.25
        %v519 = vadd.f32 %v515, 1e-08
        %v520 = vadd.f32 %v516, 1e-08
        %v521 = vadd.f32 %v517, 1e-08
        %v522 = vadd.f32 %v518, 1e-08
        %v523 = vrcp.pop %v519
        %v524 = vrcp.pop %v520
        %v525 = vrcp.pop %v521
        %v526 = vrcp.pop %v522
        %v527 = vld [vmem:[%s2] sm:$0xff]
        %vm528 = vcmask 64512
        %v530 = vsel %vm528, %v523, 0
        %v533 = vsel %vm528, %v524, 0
        %v536 = vsel %vm528, %v525, 0
        %v539 = vsel %vm528, %v526, 0
        %541 = vmatprep.subr.mxu0 0.0
        %542 = vmatpush1.msra.mxu0 %v527
        %543 = vmatprep.subr.mxu0 0.0
        %544 = vmatpush1.msra.mxu0 0.0
        %545 = vmatprep.subr.mxu0 0.0
        %546 = vmatpush1.msra.mxu0 0.0
        %547 = vmatprep.subr.mxu0 0.0
        %548 = vmatpush1.msra.mxu0 0.0
        %549 = vmatprep.subr.mxu0 0.0
        %550 = vmatpush1.msra.mxu0 0.0
        %551 = vmatprep.subr.mxu0 0.0
        %552 = vmatpush1.msra.mxu0 0.0
        %553 = vmatprep.subr.mxu0 0.0
        %554 = vmatpush1.msra.mxu0 0.0
        %555 = vmatprep.subr.mxu0 0.0
        %556 = vmatpush1.msra.mxu0 0.0
        %557 = vmatprep.subr.mxu0 0.0
        %558 = vmatpush1.msra.mxu0 0.0
        %559 = vmatprep.subr.mxu0 0.0
        %560 = vmatpush1.msra.mxu0 0.0
        %561 = vmatprep.subr.mxu0 0.0
        %562 = vmatpush1.msra.mxu0 0.0
        %563 = vmatprep.subr.mxu0 0.0
        %564 = vmatpush1.msra.mxu0 0.0
        %565 = vmatprep.subr.mxu0 0.0
        %566 = vmatpush1.msra.mxu0 0.0
        %567 = vmatprep.subr.mxu0 0.0
        %568 = vmatpush1.msra.mxu0 0.0
        %569 = vmatprep.subr.mxu0 0.0
        %570 = vmatpush1.msra.mxu0 0.0
        %571 = vmatprep.subr.mxu0 0.0
        %572 = vmatpush1.msra.mxu0 0.0
        %573 = vmatprep.subr.mxu0 0.0
        %574 = vmatpush1.msra.mxu0 0.0
        %575 = vmatprep.subr.mxu0 0.0
        %576 = vmatpush1.msra.mxu0 0.0
        %577 = vmatprep.subr.mxu0 0.0
        %578 = vmatpush1.msra.mxu0 0.0
        %579 = vmatprep.subr.mxu0 0.0
        %580 = vmatpush1.msra.mxu0 0.0
        %581 = vmatprep.subr.mxu0 0.0
        %582 = vmatpush1.msra.mxu0 0.0
        %583 = vmatprep.subr.mxu0 0.0
        %584 = vmatpush1.msra.mxu0 0.0
        %585 = vmatprep.subr.mxu0 0.0
        %586 = vmatpush1.msra.mxu0 0.0
        %587 = vmatprep.subr.mxu0 0.0
        %588 = vmatpush1.msra.mxu0 0.0
        %589 = vmatprep.subr.mxu0 0.0
        %590 = vmatpush1.msra.mxu0 0.0
        %591 = vmatprep.subr.mxu0 0.0
        %592 = vmatpush1.msra.mxu0 0.0
        %593 = vmatprep.subr.mxu0 0.0
        %594 = vmatpush1.msra.mxu0 0.0
        %595 = vmatprep.subr.mxu0 0.0
        %596 = vmatpush1.msra.mxu0 0.0
        %597 = vmatprep.subr.mxu0 0.0
        %598 = vmatpush1.msra.mxu0 0.0
        %599 = vmatprep.subr.mxu0 0.0
        %600 = vmatpush1.msra.mxu0 0.0
        %601 = vmatprep.subr.mxu0 0.0
        %602 = vmatpush1.msra.mxu0 0.0
        %603 = vmatprep.subr.mxu0 0.0
        %604 = vmatpush1.msra.mxu0 0.0
        %605 = vmatprep.mubr.f32.mxu0 0.0
        %606 = vmatmul.mubr.f32.gmra.mrb[0].mxu0 %v530
        %v607 = vpop.f32.mrb[0].mxu0
        %v608 = vadd.f32 0.0, %v607
        %v609 = vpop.f32.mrb[0].mxu0
        %610 = vmatprep.mubr.f32.mxu0 0.0
        %611 = vmatmul.mubr.f32.gmra.mrb[0].mxu0 %v533
        %v612 = vpop.f32.mrb[0].mxu0
        %v613 = vadd.f32 0.0, %v612
        %v614 = vpop.f32.mrb[0].mxu0
        %615 = vmatprep.mubr.f32.mxu0 0.0
        %616 = vmatmul.mubr.f32.gmra.mrb[0].mxu0 %v536
        %v617 = vpop.f32.mrb[0].mxu0
        %v618 = vadd.f32 0.0, %v617
        %v619 = vpop.f32.mrb[0].mxu0
        %620 = vmatprep.mubr.f32.mxu0 0.0
        %621 = vmatmul.mubr.f32.gmra.mrb[0].mxu0 %v539
        %v622 = vpop.f32.mrb[0].mxu0
        %v623 = vadd.f32 0.0, %v622
        %v624 = vpop.f32.mrb[0].mxu0
        %625 = vdwg.mxu0
        %v626 = vmul.f32 %v378, %v608
        %v627 = vmul.f32 %v379, %v613
        %v628 = vmul.f32 %v380, %v618
        %v629 = vmul.f32 %v381, %v623
        %v630 = vld [vmem:[#allocation2] sm:$0xff]
        %v631 = vld [vmem:[#allocation2 + $0x8] sm:$0xff]
        %v632 = vld [vmem:[#allocation2 + $0x10] sm:$0xff]
        %v633 = vld [vmem:[#allocation2 + $0x18] sm:$0xff]
        %vm634 = vcmask 261120
        %v636 = vsel %vm634, %v630, 0
        %v639 = vsel %vm634, %v631, 0
        %v642 = vsel %vm634, %v632, 0
        %v645 = vsel %vm634, %v633, 0
        %647 = vmatprep.subr.mxu0 0.0
        %648 = vmatpush1.msra.mxu0 %v626
        %649 = vmatprep.subr.mxu0 0.0
        %650 = vmatpush1.msra.mxu0 %v627
        %651 = vmatprep.subr.mxu0 0.0
        %652 = vmatpush1.msra.mxu0 %v628
        %653 = vmatprep.subr.mxu0 0.0
        %654 = vmatpush1.msra.mxu0 %v629
        %655 = vmatprep.subr.mxu0 0.0
        %656 = vmatpush1.msra.mxu0 0.0
        %657 = vmatprep.subr.mxu0 0.0
        %658 = vmatpush1.msra.mxu0 0.0
        %659 = vmatprep.subr.mxu0 0.0
        %660 = vmatpush1.msra.mxu0 0.0
        %661 = vmatprep.subr.mxu0 0.0
        %662 = vmatpush1.msra.mxu0 0.0
        %663 = vmatprep.subr.mxu0 0.0
        %664 = vmatpush1.msra.mxu0 0.0
        %665 = vmatprep.subr.mxu0 0.0
        %666 = vmatpush1.msra.mxu0 0.0
        %667 = vmatprep.subr.mxu0 0.0
        %668 = vmatpush1.msra.mxu0 0.0
        %669 = vmatprep.subr.mxu0 0.0
        %670 = vmatpush1.msra.mxu0 0.0
        %671 = vmatprep.subr.mxu0 0.0
        %672 = vmatpush1.msra.mxu0 0.0
        %673 = vmatprep.subr.mxu0 0.0
        %674 = vmatpush1.msra.mxu0 0.0
        %675 = vmatprep.subr.mxu0 0.0
        %676 = vmatpush1.msra.mxu0 0.0
        %677 = vmatprep.subr.mxu0 0.0
        %678 = vmatpush1.msra.mxu0 0.0
        %679 = vmatprep.subr.mxu0 0.0
        %680 = vmatpush1.msra.mxu0 0.0
        %681 = vmatprep.subr.mxu0 0.0
        %682 = vmatpush1.msra.mxu0 0.0
        %683 = vmatprep.subr.mxu0 0.0
        %684 = vmatpush1.msra.mxu0 0.0
        %685 = vmatprep.subr.mxu0 0.0
        %686 = vmatpush1.msra.mxu0 0.0
        %687 = vmatprep.subr.mxu0 0.0
        %688 = vmatpush1.msra.mxu0 0.0
        %689 = vmatprep.subr.mxu0 0.0
        %690 = vmatpush1.msra.mxu0 0.0
        %691 = vmatprep.subr.mxu0 0.0
        %692 = vmatpush1.msra.mxu0 0.0
        %693 = vmatprep.subr.mxu0 0.0
        %694 = vmatpush1.msra.mxu0 0.0
        %695 = vmatprep.subr.mxu0 0.0
        %696 = vmatpush1.msra.mxu0 0.0
        %697 = vmatprep.subr.mxu0 0.0
        %698 = vmatpush1.msra.mxu0 0.0
        %699 = vmatprep.subr.mxu0 0.0
        %700 = vmatpush1.msra.mxu0 0.0
        %701 = vmatprep.subr.mxu0 0.0
        %702 = vmatpush1.msra.mxu0 0.0
        %703 = vmatprep.subr.mxu0 0.0
        %704 = vmatpush1.msra.mxu0 0.0
        %705 = vmatprep.subr.mxu0 0.0
        %706 = vmatpush1.msra.mxu0 0.0
        %707 = vmatprep.subr.mxu0 0.0
        %708 = vmatpush1.msra.mxu0 0.0
        %709 = vmatprep.subr.mxu0 0.0
        %710 = vmatpush1.msra.mxu0 0.0
        %711 = vmatprep.mubr.f32.mxu0 0.0
        %712 = vmatmul.mubr.f32.gmra.mrb[0].mxu0 %v636
        %v713 = vpop.f32.mrb[0].mxu0
        %v714 = vadd.f32 0.0, %v713
        %v715 = vpop.f32.mrb[0].mxu0
        %716 = vmatprep.mubr.f32.mxu0 0.0
        %717 = vmatmul.mubr.f32.gmra.mrb[0].mxu0 %v639
        %v718 = vpop.f32.mrb[0].mxu0
        %v719 = vadd.f32 0.0, %v718
        %v720 = vpop.f32.mrb[0].mxu0
        %721 = vmatprep.mubr.f32.mxu0 0.0
        %722 = vmatmul.mubr.f32.gmra.mrb[0].mxu0 %v642
        %v723 = vpop.f32.mrb[0].mxu0
        %v724 = vadd.f32 0.0, %v723
        %v725 = vpop.f32.mrb[0].mxu0
        %726 = vmatprep.mubr.f32.mxu0 0.0
        %727 = vmatmul.mubr.f32.gmra.mrb[0].mxu0 %v645
        %v728 = vpop.f32.mrb[0].mxu0
        %v729 = vadd.f32 0.0, %v728
        %v730 = vpop.f32.mrb[0].mxu0
        %731 = vdwg.mxu0
        %v732 = vld [vmem:[#allocation5] sm:$0xff]
        %v733 = vld [vmem:[#allocation5 + $0x8] sm:$0xff]
        %v734 = vld [vmem:[#allocation5 + $0x10] sm:$0xff]
        %v735 = vld [vmem:[#allocation5 + $0x18] sm:$0xff]
        %v737 = vsel %vm634, %v732, 0
        %v740 = vsel %vm634, %v733, 0
        %v743 = vsel %vm634, %v734, 0
        %v746 = vsel %vm634, %v735, 0
        %748 = vmatprep.subr.mxu0 0.0
        %749 = vmatpush1.msra.mxu0 %v626
        %750 = vmatprep.subr.mxu0 0.0
        %751 = vmatpush1.msra.mxu0 %v627
        %752 = vmatprep.subr.mxu0 0.0
        %753 = vmatpush1.msra.mxu0 %v628
        %754 = vmatprep.subr.mxu0 0.0
        %755 = vmatpush1.msra.mxu0 %v629
        %756 = vmatprep.subr.mxu0 0.0
        %757 = vmatpush1.msra.mxu0 0.0
        %758 = vmatprep.subr.mxu0 0.0
        %759 = vmatpush1.msra.mxu0 0.0
        %760 = vmatprep.subr.mxu0 0.0
        %761 = vmatpush1.msra.mxu0 0.0
        %762 = vmatprep.subr.mxu0 0.0
        %763 = vmatpush1.msra.mxu0 0.0
        %764 = vmatprep.subr.mxu0 0.0
        %765 = vmatpush1.msra.mxu0 0.0
        %766 = vmatprep.subr.mxu0 0.0
        %767 = vmatpush1.msra.mxu0 0.0
        %768 = vmatprep.subr.mxu0 0.0
        %769 = vmatpush1.msra.mxu0 0.0
        %770 = vmatprep.subr.mxu0 0.0
        %771 = vmatpush1.msra.mxu0 0.0
        %772 = vmatprep.subr.mxu0 0.0
        %773 = vmatpush1.msra.mxu0 0.0
        %774 = vmatprep.subr.mxu0 0.0
        %775 = vmatpush1.msra.mxu0 0.0
        %776 = vmatprep.subr.mxu0 0.0
        %777 = vmatpush1.msra.mxu0 0.0
        %778 = vmatprep.subr.mxu0 0.0
        %779 = vmatpush1.msra.mxu0 0.0
        %780 = vmatprep.subr.mxu0 0.0
        %781 = vmatpush1.msra.mxu0 0.0
        %782 = vmatprep.subr.mxu0 0.0
        %783 = vmatpush1.msra.mxu0 0.0
        %784 = vmatprep.subr.mxu0 0.0
        %785 = vmatpush1.msra.mxu0 0.0
        %786 = vmatprep.subr.mxu0 0.0
        %787 = vmatpush1.msra.mxu0 0.0
        %788 = vmatprep.subr.mxu0 0.0
        %789 = vmatpush1.msra.mxu0 0.0
        %790 = vmatprep.subr.mxu0 0.0
        %791 = vmatpush1.msra.mxu0 0.0
        %792 = vmatprep.subr.mxu0 0.0
        %793 = vmatpush1.msra.mxu0 0.0
        %794 = vmatprep.subr.mxu0 0.0
        %795 = vmatpush1.msra.mxu0 0.0
        %796 = vmatprep.subr.mxu0 0.0
        %797 = vmatpush1.msra.mxu0 0.0
        %798 = vmatprep.subr.mxu0 0.0
        %799 = vmatpush1.msra.mxu0 0.0
        %800 = vmatprep.subr.mxu0 0.0
        %801 = vmatpush1.msra.mxu0 0.0
        %802 = vmatprep.subr.mxu0 0.0
        %803 = vmatpush1.msra.mxu0 0.0
        %804 = vmatprep.subr.mxu0 0.0
        %805 = vmatpush1.msra.mxu0 0.0
        %806 = vmatprep.subr.mxu0 0.0
        %807 = vmatpush1.msra.mxu0 0.0
        %808 = vmatprep.subr.mxu0 0.0
        %809 = vmatpush1.msra.mxu0 0.0
        %810 = vmatprep.subr.mxu0 0.0
        %811 = vmatpush1.msra.mxu0 0.0
        %812 = vmatprep.mubr.f32.mxu0 0.0
        %813 = vmatmul.mubr.f32.gmra.mrb[0].mxu0 %v737
        %v814 = vpop.f32.mrb[0].mxu0
        %v815 = vadd.f32 0.0, %v814
        %v816 = vpop.f32.mrb[0].mxu0
        %817 = vmatprep.mubr.f32.mxu0 0.0
        %818 = vmatmul.mubr.f32.gmra.mrb[0].mxu0 %v740
        %v819 = vpop.f32.mrb[0].mxu0
        %v820 = vadd.f32 0.0, %v819
        %v821 = vpop.f32.mrb[0].mxu0
        %822 = vmatprep.mubr.f32.mxu0 0.0
        %823 = vmatmul.mubr.f32.gmra.mrb[0].mxu0 %v743
        %v824 = vpop.f32.mrb[0].mxu0
        %v825 = vadd.f32 0.0, %v824
        %v826 = vpop.f32.mrb[0].mxu0
        %827 = vmatprep.mubr.f32.mxu0 0.0
        %828 = vmatmul.mubr.f32.gmra.mrb[0].mxu0 %v746
        %v829 = vpop.f32.mrb[0].mxu0
        %v830 = vadd.f32 0.0, %v829
        %v831 = vpop.f32.mrb[0].mxu0
        %832 = vdwg.mxu0
        %v833 = vld [vmem:[#allocation7] sm:$0xff]
        %v834 = vld [vmem:[#allocation7 + $0x8] sm:$0xff]
        %v835 = vld [vmem:[#allocation7 + $0x10] sm:$0xff]
        %v836 = vld [vmem:[#allocation7 + $0x18] sm:$0xff]
        %v837 = vld [vmem:[#allocation7 + $0x20] sm:$0xff]
        %v838 = vld [vmem:[#allocation7 + $0x28] sm:$0xff]
        %v839 = vld [vmem:[#allocation7 + $0x30] sm:$0xff]
        %v840 = vld [vmem:[#allocation7 + $0x38] sm:$0xff]
        %v841 = vld [vmem:[#allocation7 + $0x40] sm:$0xff]
        %v842 = vld [vmem:[#allocation7 + $0x48] sm:$0xff]
        %v843 = vld [vmem:[#allocation7 + $0x50] sm:$0xff]
        %v844 = vld [vmem:[#allocation7 + $0x58] sm:$0xff]
        %v845 = vld [vmem:[#allocation7 + $0x60] sm:$0xff]
        %v846 = vld [vmem:[#allocation7 + $0x68] sm:$0xff]
        %v847 = vld [vmem:[#allocation7 + $0x70] sm:$0xff]
        %v848 = vld [vmem:[#allocation7 + $0x78] sm:$0xff]
        %s849 = scalar_lea.vmem [#allocation7], 128
        %v850 = vld [vmem:[%s849] sm:$0xff]
        %v851 = vld [vmem:[%s849 + $0x8] sm:$0xff]
        %v852 = vld [vmem:[%s849 + $0x10] sm:$0xff]
        %v853 = vld [vmem:[%s849 + $0x18] sm:$0xff]
        %v854 = vld [vmem:[%s849 + $0x20] sm:$0xff]
        %v855 = vld [vmem:[%s849 + $0x28] sm:$0xff]
        %v856 = vld [vmem:[%s849 + $0x30] sm:$0xff]
        %v857 = vld [vmem:[%s849 + $0x38] sm:$0xff]
        %v858 = vld [vmem:[%s849 + $0x40] sm:$0xff]
        %v859 = vld [vmem:[%s849 + $0x48] sm:$0xff]
        %v860 = vld [vmem:[%s849 + $0x50] sm:$0xff]
        %v861 = vld [vmem:[%s849 + $0x58] sm:$0xff]
        %v862 = vld [vmem:[%s849 + $0x60] sm:$0xff]
        %v863 = vld [vmem:[%s849 + $0x68] sm:$0xff]
        %v864 = vld [vmem:[%s849 + $0x70] sm:$0xff]
        %v865 = vld [vmem:[%s849 + $0x78] sm:$0xff]
        %866 = vmatprep.subr.mxu0 0.0
        %867 = vmatpush1.msra.mxu0 %v850
        %868 = vmatprep.subr.mxu0 0.0
        %869 = vmatpush1.msra.mxu0 %v851
        %870 = vmatprep.subr.mxu0 0.0
        %871 = vmatpush1.msra.mxu0 %v852
        %872 = vmatprep.subr.mxu0 0.0
        %873 = vmatpush1.msra.mxu0 %v853
        %874 = vmatprep.subr.mxu0 0.0
        %875 = vmatpush1.msra.mxu0 %v854
        %876 = vmatprep.subr.mxu0 0.0
        %877 = vmatpush1.msra.mxu0 %v855
        %878 = vmatprep.subr.mxu0 0.0
        %879 = vmatpush1.msra.mxu0 %v856
        %880 = vmatprep.subr.mxu0 0.0
        %881 = vmatpush1.msra.mxu0 %v857
        %882 = vmatprep.subr.mxu0 0.0
        %883 = vmatpush1.msra.mxu0 %v858
        %884 = vmatprep.subr.mxu0 0.0
        %885 = vmatpush1.msra.mxu0 %v859
        %886 = vmatprep.subr.mxu0 0.0
        %887 = vmatpush1.msra.mxu0 %v860
        %888 = vmatprep.subr.mxu0 0.0
        %889 = vmatpush1.msra.mxu0 %v861
        %890 = vmatprep.subr.mxu0 0.0
        %891 = vmatpush1.msra.mxu0 %v862
        %892 = vmatprep.subr.mxu0 0.0
        %893 = vmatpush1.msra.mxu0 %v863
        %894 = vmatprep.subr.mxu0 0.0
        %895 = vmatpush1.msra.mxu0 %v864
        %896 = vmatprep.subr.mxu0 0.0
        %897 = vmatpush1.msra.mxu0 %v865
        %898 = vmatprep.subr.mxu0 0.0
        %899 = vmatpush1.msra.mxu0 0.0
        %900 = vmatprep.subr.mxu0 0.0
        %901 = vmatpush1.msra.mxu0 0.0
        %902 = vmatprep.subr.mxu0 0.0
        %903 = vmatpush1.msra.mxu0 0.0
        %904 = vmatprep.subr.mxu0 0.0
        %905 = vmatpush1.msra.mxu0 0.0
        %906 = vmatprep.subr.mxu0 0.0
        %907 = vmatpush1.msra.mxu0 0.0
        %908 = vmatprep.subr.mxu0 0.0
        %909 = vmatpush1.msra.mxu0 0.0
        %910 = vmatprep.subr.mxu0 0.0
        %911 = vmatpush1.msra.mxu0 0.0
        %912 = vmatprep.subr.mxu0 0.0
        %913 = vmatpush1.msra.mxu0 0.0
        %914 = vmatprep.subr.mxu0 0.0
        %915 = vmatpush1.msra.mxu0 0.0
        %916 = vmatprep.subr.mxu0 0.0
        %917 = vmatpush1.msra.mxu0 0.0
        %918 = vmatprep.subr.mxu0 0.0
        %919 = vmatpush1.msra.mxu0 0.0
        %920 = vmatprep.subr.mxu0 0.0
        %921 = vmatpush1.msra.mxu0 0.0
        %922 = vmatprep.subr.mxu0 0.0
        %923 = vmatpush1.msra.mxu0 0.0
        %924 = vmatprep.subr.mxu0 0.0
        %925 = vmatpush1.msra.mxu0 0.0
        %926 = vmatprep.subr.mxu0 0.0
        %927 = vmatpush1.msra.mxu0 0.0
        %928 = vmatprep.subr.mxu0 0.0
        %929 = vmatpush1.msra.mxu0 0.0
        %930 = vmatprep.mubr.f32.mxu0 0.0
        %931 = vmatmul.mubr.f32.gmra.mrb[0].mxu0 %v626
        %v932 = vpop.f32.mrb[0].mxu0
        %v933 = vadd.f32 0.0, %v932
        %v934 = vpop.f32.mrb[0].mxu0
        %935 = vmatprep.mubr.f32.mxu0 0.0
        %936 = vmatmul.mubr.f32.gmra.mrb[0].mxu0 %v627
        %v937 = vpop.f32.mrb[0].mxu0
        %v938 = vadd.f32 0.0, %v937
        %v939 = vpop.f32.mrb[0].mxu0
        %940 = vmatprep.mubr.f32.mxu0 0.0
        %941 = vmatmul.mubr.f32.gmra.mrb[0].mxu0 %v628
        %v942 = vpop.f32.mrb[0].mxu0
        %v943 = vadd.f32 0.0, %v942
        %v944 = vpop.f32.mrb[0].mxu0
        %945 = vmatprep.mubr.f32.mxu0 0.0
        %946 = vmatmul.mubr.f32.gmra.mrb[0].mxu0 %v629
        %v947 = vpop.f32.mrb[0].mxu0
        %v948 = vadd.f32 0.0, %v947
        %v949 = vpop.f32.mrb[0].mxu0
        %950 = vdwg.mxu0
        %951 = vmatprep.subr.mxu0 0.0
        %952 = vmatpush1.msra.mxu0 %v833
        %953 = vmatprep.subr.mxu0 0.0
        %954 = vmatpush1.msra.mxu0 %v834
        %955 = vmatprep.subr.mxu0 0.0
        %956 = vmatpush1.msra.mxu0 %v835
        %957 = vmatprep.subr.mxu0 0.0
        %958 = vmatpush1.msra.mxu0 %v836
        %959 = vmatprep.subr.mxu0 0.0
        %960 = vmatpush1.msra.mxu0 %v837
        %961 = vmatprep.subr.mxu0 0.0
        %962 = vmatpush1.msra.mxu0 %v838
        %963 = vmatprep.subr.mxu0 0.0
        %964 = vmatpush1.msra.mxu0 %v839
        %965 = vmatprep.subr.mxu0 0.0
        %966 = vmatpush1.msra.mxu0 %v840
        %967 = vmatprep.subr.mxu0 0.0
        %968 = vmatpush1.msra.mxu0 %v841
        %969 = vmatprep.subr.mxu0 0.0
        %970 = vmatpush1.msra.mxu0 %v842
        %971 = vmatprep.subr.mxu0 0.0
        %972 = vmatpush1.msra.mxu0 %v843
        %973 = vmatprep.subr.mxu0 0.0
        %974 = vmatpush1.msra.mxu0 %v844
        %975 = vmatprep.subr.mxu0 0.0
        %976 = vmatpush1.msra.mxu0 %v845
        %977 = vmatprep.subr.mxu0 0.0
        %978 = vmatpush1.msra.mxu0 %v846
        %979 = vmatprep.subr.mxu0 0.0
        %980 = vmatpush1.msra.mxu0 %v847
        %981 = vmatprep.subr.mxu0 0.0
        %982 = vmatpush1.msra.mxu0 %v848
        %983 = vmatprep.subr.mxu0 0.0
        %984 = vmatpush1.msra.mxu0 0.0
        %985 = vmatprep.subr.mxu0 0.0
        %986 = vmatpush1.msra.mxu0 0.0
        %987 = vmatprep.subr.mxu0 0.0
        %988 = vmatpush1.msra.mxu0 0.0
        %989 = vmatprep.subr.mxu0 0.0
        %990 = vmatpush1.msra.mxu0 0.0
        %991 = vmatprep.subr.mxu0 0.0
        %992 = vmatpush1.msra.mxu0 0.0
        %993 = vmatprep.subr.mxu0 0.0
        %994 = vmatpush1.msra.mxu0 0.0
        %995 = vmatprep.subr.mxu0 0.0
        %996 = vmatpush1.msra.mxu0 0.0
        %997 = vmatprep.subr.mxu0 0.0
        %998 = vmatpush1.msra.mxu0 0.0
        %999 = vmatprep.subr.mxu0 0.0
        %1000 = vmatpush1.msra.mxu0 0.0
        %1001 = vmatprep.subr.mxu0 0.0
        %1002 = vmatpush1.msra.mxu0 0.0
        %1003 = vmatprep.subr.mxu0 0.0
        %1004 = vmatpush1.msra.mxu0 0.0
        %1005 = vmatprep.subr.mxu0 0.0
        %1006 = vmatpush1.msra.mxu0 0.0
        %1007 = vmatprep.subr.mxu0 0.0
        %1008 = vmatpush1.msra.mxu0 0.0
        %1009 = vmatprep.subr.mxu0 0.0
        %1010 = vmatpush1.msra.mxu0 0.0
        %1011 = vmatprep.subr.mxu0 0.0
        %1012 = vmatpush1.msra.mxu0 0.0
        %1013 = vmatprep.subr.mxu0 0.0
        %1014 = vmatpush1.msra.mxu0 0.0
        %1015 = vmatprep.mubr.f32.mxu0 0.0
        %1016 = vmatmul.mubr.f32.gmra.mrb[0].mxu0 %v714
        %v1017 = vpop.f32.mrb[0].mxu0
        %v1018 = vadd.f32 %v933, %v1017
        %v1019 = vpop.f32.mrb[0].mxu0
        %1020 = vmatprep.mubr.f32.mxu0 0.0
        %1021 = vmatmul.mubr.f32.gmra.mrb[0].mxu0 %v719
        %v1022 = vpop.f32.mrb[0].mxu0
        %v1023 = vadd.f32 %v938, %v1022
        %v1024 = vpop.f32.mrb[0].mxu0
        %1025 = vmatprep.mubr.f32.mxu0 0.0
        %1026 = vmatmul.mubr.f32.gmra.mrb[0].mxu0 %v724
        %v1027 = vpop.f32.mrb[0].mxu0
        %v1028 = vadd.f32 %v943, %v1027
        %v1029 = vpop.f32.mrb[0].mxu0
        %1030 = vmatprep.mubr.f32.mxu0 0.0
        %1031 = vmatmul.mubr.f32.gmra.mrb[0].mxu0 %v729
        %v1032 = vpop.f32.mrb[0].mxu0
        %v1033 = vadd.f32 %v948, %v1032
        %v1034 = vpop.f32.mrb[0].mxu0
        %1035 = vdwg.mxu0
        %s1036 = scalar_lea.vmem [#allocation7], 256
        %v1037 = vld [vmem:[%s1036] sm:$0xff]
        %v1038 = vld [vmem:[%s1036 + $0x8] sm:$0xff]
        %v1039 = vld [vmem:[%s1036 + $0x10] sm:$0xff]
        %v1040 = vld [vmem:[%s1036 + $0x18] sm:$0xff]
        %v1041 = vld [vmem:[%s1036 + $0x20] sm:$0xff]
        %v1042 = vld [vmem:[%s1036 + $0x28] sm:$0xff]
        %v1043 = vld [vmem:[%s1036 + $0x30] sm:$0xff]
        %v1044 = vld [vmem:[%s1036 + $0x38] sm:$0xff]
        %v1045 = vld [vmem:[%s1036 + $0x40] sm:$0xff]
        %v1046 = vld [vmem:[%s1036 + $0x48] sm:$0xff]
        %v1047 = vld [vmem:[%s1036 + $0x50] sm:$0xff]
        %v1048 = vld [vmem:[%s1036 + $0x58] sm:$0xff]
        %v1049 = vld [vmem:[%s1036 + $0x60] sm:$0xff]
        %v1050 = vld [vmem:[%s1036 + $0x68] sm:$0xff]
        %v1051 = vld [vmem:[%s1036 + $0x70] sm:$0xff]
        %v1052 = vld [vmem:[%s1036 + $0x78] sm:$0xff]
        %1053 = vmatprep.subr.mxu0 0.0
        %1054 = vmatpush1.msra.mxu0 %v1037
        %1055 = vmatprep.subr.mxu0 0.0
        %1056 = vmatpush1.msra.mxu0 %v1038
        %1057 = vmatprep.subr.mxu0 0.0
        %1058 = vmatpush1.msra.mxu0 %v1039
        %1059 = vmatprep.subr.mxu0 0.0
        %1060 = vmatpush1.msra.mxu0 %v1040
        %1061 = vmatprep.subr.mxu0 0.0
        %1062 = vmatpush1.msra.mxu0 %v1041
        %1063 = vmatprep.subr.mxu0 0.0
        %1064 = vmatpush1.msra.mxu0 %v1042
        %1065 = vmatprep.subr.mxu0 0.0
        %1066 = vmatpush1.msra.mxu0 %v1043
        %1067 = vmatprep.subr.mxu0 0.0
        %1068 = vmatpush1.msra.mxu0 %v1044
        %1069 = vmatprep.subr.mxu0 0.0
        %1070 = vmatpush1.msra.mxu0 %v1045
        %1071 = vmatprep.subr.mxu0 0.0
        %1072 = vmatpush1.msra.mxu0 %v1046
        %1073 = vmatprep.subr.mxu0 0.0
        %1074 = vmatpush1.msra.mxu0 %v1047
        %1075 = vmatprep.subr.mxu0 0.0
        %1076 = vmatpush1.msra.mxu0 %v1048
        %1077 = vmatprep.subr.mxu0 0.0
        %1078 = vmatpush1.msra.mxu0 %v1049
        %1079 = vmatprep.subr.mxu0 0.0
        %1080 = vmatpush1.msra.mxu0 %v1050
        %1081 = vmatprep.subr.mxu0 0.0
        %1082 = vmatpush1.msra.mxu0 %v1051
        %1083 = vmatprep.subr.mxu0 0.0
        %1084 = vmatpush1.msra.mxu0 %v1052
        %1085 = vmatprep.subr.mxu0 0.0
        %1086 = vmatpush1.msra.mxu0 0.0
        %1087 = vmatprep.subr.mxu0 0.0
        %1088 = vmatpush1.msra.mxu0 0.0
        %1089 = vmatprep.subr.mxu0 0.0
        %1090 = vmatpush1.msra.mxu0 0.0
        %1091 = vmatprep.subr.mxu0 0.0
        %1092 = vmatpush1.msra.mxu0 0.0
        %1093 = vmatprep.subr.mxu0 0.0
        %1094 = vmatpush1.msra.mxu0 0.0
        %1095 = vmatprep.subr.mxu0 0.0
        %1096 = vmatpush1.msra.mxu0 0.0
        %1097 = vmatprep.subr.mxu0 0.0
        %1098 = vmatpush1.msra.mxu0 0.0
        %1099 = vmatprep.subr.mxu0 0.0
        %1100 = vmatpush1.msra.mxu0 0.0
        %1101 = vmatprep.subr.mxu0 0.0
        %1102 = vmatpush1.msra.mxu0 0.0
        %1103 = vmatprep.subr.mxu0 0.0
        %1104 = vmatpush1.msra.mxu0 0.0
        %1105 = vmatprep.subr.mxu0 0.0
        %1106 = vmatpush1.msra.mxu0 0.0
        %1107 = vmatprep.subr.mxu0 0.0
        %1108 = vmatpush1.msra.mxu0 0.0
        %1109 = vmatprep.subr.mxu0 0.0
        %1110 = vmatpush1.msra.mxu0 0.0
        %1111 = vmatprep.subr.mxu0 0.0
        %1112 = vmatpush1.msra.mxu0 0.0
        %1113 = vmatprep.subr.mxu0 0.0
        %1114 = vmatpush1.msra.mxu0 0.0
        %1115 = vmatprep.subr.mxu0 0.0
        %1116 = vmatpush1.msra.mxu0 0.0
        %1117 = vmatprep.mubr.f32.mxu0 0.0
        %1118 = vmatmul.mubr.f32.gmra.mrb[0].mxu0 %v815
        %v1119 = vpop.f32.mrb[0].mxu0
        %v1120 = vadd.f32 0.0, %v1119
        %v1121 = vpop.f32.mrb[0].mxu0
        %1122 = vmatprep.mubr.f32.mxu0 0.0
        %1123 = vmatmul.mubr.f32.gmra.mrb[0].mxu0 %v820
        %v1124 = vpop.f32.mrb[0].mxu0
        %v1125 = vadd.f32 0.0, %v1124
        %v1126 = vpop.f32.mrb[0].mxu0
        %1127 = vmatprep.mubr.f32.mxu0 0.0
        %1128 = vmatmul.mubr.f32.gmra.mrb[0].mxu0 %v825
        %v1129 = vpop.f32.mrb[0].mxu0
        %v1130 = vadd.f32 0.0, %v1129
        %v1131 = vpop.f32.mrb[0].mxu0
        %1132 = vmatprep.mubr.f32.mxu0 0.0
        %1133 = vmatmul.mubr.f32.gmra.mrb[0].mxu0 %v830
        %v1134 = vpop.f32.mrb[0].mxu0
        %v1135 = vadd.f32 0.0, %v1134
        %v1136 = vpop.f32.mrb[0].mxu0
        %1137 = vdwg.mxu0
        %v1138 = vadd.f32 %v1018, %v1120
        %v1139 = vadd.f32 %v1023, %v1125
        %v1140 = vadd.f32 %v1028, %v1130
        %v1141 = vadd.f32 %v1033, %v1135
        %v1142 = vld [vmem:[%s6] sm:$0x1]
        %v1144 = vlaneseq
        %v1145 = vshrl.u32 %v1144, 7
        %v1146 = vsub.s32 0, %v1145
        %v1147 = vrot.slane %v1142, %v1146
        %v1149 = vadd.f32 %v1138, %v1147
        %v1150 = vadd.f32 %v1139, %v1147
        %v1151 = vadd.f32 %v1140, %v1147
        %v1152 = vadd.f32 %v1141, %v1147
        %v1153 = vand.u32 2147483647, %v1149
        %vm1154 = vcmp.le.f32.partialorder %v1153, 0.7853982
        %vm1155 = vcmp.lt.s32.totalorder %v1149, 0
        %v1156 = vand.u32 %v1149, 2139095040
        %v1157 = vshrl.u32 %v1156, 23
        %v1158 = vsub.s32 %v1157, 127
        %v1159 = vand.u32 2147483647, %v1149
        %v1160 = vand.u32 %v1159, 8388607
        %v1161 = vor.u32 %v1160, 8388608
        %v1162 = vsub.s32 0, %v1161
        %v1163 = vadd.s32 %v1158, 1
        %vm1164 = vcmp.gt.s32.totalorder %v1163, 0
        %v1165 = vsel %vm1164, %v1163, 0
        %v1166 = vshrl.u32 %v1165, 5
        %v1167 = vand.u32 %v1165, 31
        %v1168 = vsub.s32 32, %v1167
        %v1169 = vshrl.u32 683565275, %v1168
        %v1170 = vshll.u32 683565275, %v1167
        %v1171 = vshrl.u32 2475754826, %v1168
        %v1172 = vor.u32 %v1170, %v1171
        %v1173 = vshll.u32 2475754826, %v1167
        %v1174 = vshrl.u32 2131351028, %v1168
        %v1175 = vor.u32 %v1173, %v1174
        %v1176 = vshll.u32 2131351028, %v1167
        %v1177 = vshrl.u32 2102212464, %v1168
        %v1178 = vor.u32 %v1176, %v1177
        %v1179 = vshll.u32 2102212464, %v1167
        %v1180 = vshrl.u32 920167782, %v1168
        %v1181 = vor.u32 %v1179, %v1180
        %v1182 = vshll.u32 920167782, %v1167
        %v1183 = vshrl.u32 1326507024, %v1168
        %v1184 = vor.u32 %v1182, %v1183
        %vm1185 = vcmp.lt.s32.totalorder %v1166, 1
        %vm1186 = vcmp.lt.s32.totalorder %v1166, 2
        %vm1187 = vcmp.lt.s32.totalorder %v1166, 3
        %vm1188 = vcmp.lt.s32.totalorder %v1166, 4
        %v1189 = vsel %vm1185, %v1169, %v1172
        %v1190 = vsel %vm1188, %v1178, 2102212464
        %v1191 = vsel %vm1187, %v1175, %v1190
        %v1192 = vsel %vm1186, %v1189, %v1191
        %v1193 = vsel %vm1185, %v1172, %v1175
        %v1194 = vsel %vm1188, %v1181, 920167782
        %v1195 = vsel %vm1187, %v1178, %v1194
        %v1196 = vsel %vm1186, %v1193, %v1195
        %v1197 = vsel %vm1185, %v1175, %v1178
        %v1198 = vsel %vm1188, %v1184, 1326507024
        %v1199 = vsel %vm1187, %v1181, %v1198
        %v1200 = vsel %vm1186, %v1197, %v1199
        %v1201 = vshll.u32 %v1161, 8
        %v1202 = vmul.u32.u64.compose %v1201, %v1200
        %v1203 = vextract.low.u32 %v1202
        %v1204 = vextract.high.u32 %v1202
        %v1205 = vmul.u32.u64.compose %v1201, %v1196
        %v1206 = vextract.low.u32 %v1205
        %v1207 = vextract.high.u32 %v1205
        %v1208 = vmul.u32 %v1201, %v1192
        %v1209 = vadd.s32 %v1204, %v1206
        %vm1210 = vc.u32 %v1204, %v1206
        %v1211 = vadd.s32 %v1207, 1
        %v1212 = vsel %vm1210, %v1211, %v1207
        %v1213 = vadd.s32 %v1208, %v1212
        %v1214 = vadd.s32 %v1213, 536870912
        %v1215 = vshrl.u32 %v1214, 30
        %v1216 = vshll.u32 %v1215, 30
        %v1217 = vsub.s32 %v1213, %v1216
        %vm1218 = vcmp.lt.s32.totalorder %v1217, 0
        %v1219 = vsub.s32 0, %v1217
        %v1220 = vsel %vm1218, %v1219, %v1217
        %v1221 = vclz %v1220
        %v1222 = vsub.s32 %v1221, 2
        %vm1223 = vcmp.gt.s32.totalorder 0, %v1222
        %v1224 = vsel %vm1223, 0, %v1222
        %v1225 = vsub.s32 32, %v1224
        %v1226 = vshll.u32 %v1217, %v1224
        %v1227 = vshrl.u32 %v1209, %v1225
        %v1228 = vor.u32 %v1226, %v1227
        %v1229 = vsub.s32 4294967266, %v1224
        %v1230 = vadd.s32 %v1229, 127
        %v1231 = vshll.u32 %v1230, 23
        %v1232 = vor.u32 4788187, %v1231
        %v1233 = vand.u32 2147483647, %v1232
        %v1235 = vcvt.s32.f32 %v1228
        %v1236 = vmul.f32 %v1235, %v1233
        %v1237 = vxor.u32 %v1236, 2147483648
        %v1238 = vsel %vm1155, %v1237, %v1236
        %v1239 = vsub.s32 4, %v1215
        %v1240 = vsel %vm1155, %v1239, %v1215
        %v1241 = vsel %vm1154, %v1149, %v1238
        %v1242 = vsel %vm1154, 0, %v1240
        %v1243 = vcosq.f32.pop %v1241
        %v1244 = vsinq.f32.pop %v1241
        %vm1245 = vweird.f32 %v1149
        %v1246 = vadd.s32 %v1242, 3
        %v1247 = vand.u32 %v1246, 3
        %vm1248 = vcmp.lt.s32.totalorder %v1247, 2
        %vm1249 = vcmp.eq.s32.totalorder %v1247, 0
        %v1250 = vxor.u32 %v1244, 2147483648
        %v1251 = vsel %vm1249, %v1243, %v1250
        %vm1252 = vcmp.eq.s32.totalorder %v1247, 2
        %v1253 = vxor.u32 %v1243, 2147483648
        %v1254 = vsel %vm1252, %v1253, %v1244
        %v1255 = vsel %vm1248, %v1251, %v1254
        %v1256 = vsel %vm1245, nan, %v1255
        %v1257 = vand.u32 2147483647, %v1150
        %vm1258 = vcmp.le.f32.partialorder %v1257, 0.7853982
        %vm1259 = vcmp.lt.s32.totalorder %v1150, 0
        %v1260 = vand.u32 %v1150, 2139095040
        %v1261 = vshrl.u32 %v1260, 23
        %v1262 = vsub.s32 %v1261, 127
        %v1263 = vand.u32 2147483647, %v1150
        %v1264 = vand.u32 %v1263, 8388607
        %v1265 = vor.u32 %v1264, 8388608
        %v1266 = vsub.s32 0, %v1265
        %v1267 = vadd.s32 %v1262, 1
        %vm1268 = vcmp.gt.s32.totalorder %v1267, 0
        %v1269 = vsel %vm1268, %v1267, 0
        %v1270 = vshrl.u32 %v1269, 5
        %v1271 = vand.u32 %v1269, 31
        %v1272 = vsub.s32 32, %v1271
        %v1273 = vshrl.u32 683565275, %v1272
        %v1274 = vshll.u32 683565275, %v1271
        %v1275 = vshrl.u32 2475754826, %v1272
        %v1276 = vor.u32 %v1274, %v1275
        %v1277 = vshll.u32 2475754826, %v1271
        %v1278 = vshrl.u32 2131351028, %v1272
        %v1279 = vor.u32 %v1277, %v1278
        %v1280 = vshll.u32 2131351028, %v1271
        %v1281 = vshrl.u32 2102212464, %v1272
        %v1282 = vor.u32 %v1280, %v1281
        %v1283 = vshll.u32 2102212464, %v1271
        %v1284 = vshrl.u32 920167782, %v1272
        %v1285 = vor.u32 %v1283, %v1284
        %v1286 = vshll.u32 920167782, %v1271
        %v1287 = vshrl.u32 1326507024, %v1272
        %v1288 = vor.u32 %v1286, %v1287
        %vm1289 = vcmp.lt.s32.totalorder %v1270, 1
        %vm1290 = vcmp.lt.s32.totalorder %v1270, 2
        %vm1291 = vcmp.lt.s32.totalorder %v1270, 3
        %vm1292 = vcmp.lt.s32.totalorder %v1270, 4
        %v1293 = vsel %vm1289, %v1273, %v1276
        %v1294 = vsel %vm1292, %v1282, 2102212464
        %v1295 = vsel %vm1291, %v1279, %v1294
        %v1296 = vsel %vm1290, %v1293, %v1295
        %v1297 = vsel %vm1289, %v1276, %v1279
        %v1298 = vsel %vm1292, %v1285, 920167782
        %v1299 = vsel %vm1291, %v1282, %v1298
        %v1300 = vsel %vm1290, %v1297, %v1299
        %v1301 = vsel %vm1289, %v1279, %v1282
        %v1302 = vsel %vm1292, %v1288, 1326507024
        %v1303 = vsel %vm1291, %v1285, %v1302
        %v1304 = vsel %vm1290, %v1301, %v1303
        %v1305 = vshll.u32 %v1265, 8
        %v1306 = vmul.u32.u64.compose %v1305, %v1304
        %v1307 = vextract.low.u32 %v1306
        %v1308 = vextract.high.u32 %v1306
        %v1309 = vmul.u32.u64.compose %v1305, %v1300
        %v1310 = vextract.low.u32 %v1309
        %v1311 = vextract.high.u32 %v1309
        %v1312 = vmul.u32 %v1305, %v1296
        %v1313 = vadd.s32 %v1308, %v1310
        %vm1314 = vc.u32 %v1308, %v1310
        %v1315 = vadd.s32 %v1311, 1
        %v1316 = vsel %vm1314, %v1315, %v1311
        %v1317 = vadd.s32 %v1312, %v1316
        %v1318 = vadd.s32 %v1317, 536870912
        %v1319 = vshrl.u32 %v1318, 30
        %v1320 = vshll.u32 %v1319, 30
        %v1321 = vsub.s32 %v1317, %v1320
        %vm1322 = vcmp.lt.s32.totalorder %v1321, 0
        %v1323 = vsub.s32 0, %v1321
        %v1324 = vsel %vm1322, %v1323, %v1321
        %v1325 = vclz %v1324
        %v1326 = vsub.s32 %v1325, 2
        %vm1327 = vcmp.gt.s32.totalorder 0, %v1326
        %v1328 = vsel %vm1327, 0, %v1326
        %v1329 = vsub.s32 32, %v1328
        %v1330 = vshll.u32 %v1321, %v1328
        %v1331 = vshrl.u32 %v1313, %v1329
        %v1332 = vor.u32 %v1330, %v1331
        %v1333 = vsub.s32 4294967266, %v1328
        %v1334 = vadd.s32 %v1333, 127
        %v1335 = vshll.u32 %v1334, 23
        %v1336 = vor.u32 4788187, %v1335
        %v1337 = vand.u32 2147483647, %v1336
        %v1339 = vcvt.s32.f32 %v1332
        %v1340 = vmul.f32 %v1339, %v1337
        %v1341 = vxor.u32 %v1340, 2147483648
        %v1342 = vsel %vm1259, %v1341, %v1340
        %v1343 = vsub.s32 4, %v1319
        %v1344 = vsel %vm1259, %v1343, %v1319
        %v1345 = vsel %vm1258, %v1150, %v1342
        %v1346 = vsel %vm1258, 0, %v1344
        %v1347 = vcosq.f32.pop %v1345
        %v1348 = vsinq.f32.pop %v1345
        %vm1349 = vweird.f32 %v1150
        %v1350 = vadd.s32 %v1346, 3
        %v1351 = vand.u32 %v1350, 3
        %vm1352 = vcmp.lt.s32.totalorder %v1351, 2
        %vm1353 = vcmp.eq.s32.totalorder %v1351, 0
        %v1354 = vxor.u32 %v1348, 2147483648
        %v1355 = vsel %vm1353, %v1347, %v1354
        %vm1356 = vcmp.eq.s32.totalorder %v1351, 2
        %v1357 = vxor.u32 %v1347, 2147483648
        %v1358 = vsel %vm1356, %v1357, %v1348
        %v1359 = vsel %vm1352, %v1355, %v1358
        %v1360 = vsel %vm1349, nan, %v1359
        %v1361 = vand.u32 2147483647, %v1151
        %vm1362 = vcmp.le.f32.partialorder %v1361, 0.7853982
        %vm1363 = vcmp.lt.s32.totalorder %v1151, 0
        %v1364 = vand.u32 %v1151, 2139095040
        %v1365 = vshrl.u32 %v1364, 23
        %v1366 = vsub.s32 %v1365, 127
        %v1367 = vand.u32 2147483647, %v1151
        %v1368 = vand.u32 %v1367, 8388607
        %v1369 = vor.u32 %v1368, 8388608
        %v1370 = vsub.s32 0, %v1369
        %v1371 = vadd.s32 %v1366, 1
        %vm1372 = vcmp.gt.s32.totalorder %v1371, 0
        %v1373 = vsel %vm1372, %v1371, 0
        %v1374 = vshrl.u32 %v1373, 5
        %v1375 = vand.u32 %v1373, 31
        %v1376 = vsub.s32 32, %v1375
        %v1377 = vshrl.u32 683565275, %v1376
        %v1378 = vshll.u32 683565275, %v1375
        %v1379 = vshrl.u32 2475754826, %v1376
        %v1380 = vor.u32 %v1378, %v1379
        %v1381 = vshll.u32 2475754826, %v1375
        %v1382 = vshrl.u32 2131351028, %v1376
        %v1383 = vor.u32 %v1381, %v1382
        %v1384 = vshll.u32 2131351028, %v1375
        %v1385 = vshrl.u32 2102212464, %v1376
        %v1386 = vor.u32 %v1384, %v1385
        %v1387 = vshll.u32 2102212464, %v1375
        %v1388 = vshrl.u32 920167782, %v1376
        %v1389 = vor.u32 %v1387, %v1388
        %v1390 = vshll.u32 920167782, %v1375
        %v1391 = vshrl.u32 1326507024, %v1376
        %v1392 = vor.u32 %v1390, %v1391
        %vm1393 = vcmp.lt.s32.totalorder %v1374, 1
        %vm1394 = vcmp.lt.s32.totalorder %v1374, 2
        %vm1395 = vcmp.lt.s32.totalorder %v1374, 3
        %vm1396 = vcmp.lt.s32.totalorder %v1374, 4
        %v1397 = vsel %vm1393, %v1377, %v1380
        %v1398 = vsel %vm1396, %v1386, 2102212464
        %v1399 = vsel %vm1395, %v1383, %v1398
        %v1400 = vsel %vm1394, %v1397, %v1399
        %v1401 = vsel %vm1393, %v1380, %v1383
        %v1402 = vsel %vm1396, %v1389, 920167782
        %v1403 = vsel %vm1395, %v1386, %v1402
        %v1404 = vsel %vm1394, %v1401, %v1403
        %v1405 = vsel %vm1393, %v1383, %v1386
        %v1406 = vsel %vm1396, %v1392, 1326507024
        %v1407 = vsel %vm1395, %v1389, %v1406
        %v1408 = vsel %vm1394, %v1405, %v1407
        %v1409 = vshll.u32 %v1369, 8
        %v1410 = vmul.u32.u64.compose %v1409, %v1408
        %v1411 = vextract.low.u32 %v1410
        %v1412 = vextract.high.u32 %v1410
        %v1413 = vmul.u32.u64.compose %v1409, %v1404
        %v1414 = vextract.low.u32 %v1413
        %v1415 = vextract.high.u32 %v1413
        %v1416 = vmul.u32 %v1409, %v1400
        %v1417 = vadd.s32 %v1412, %v1414
        %vm1418 = vc.u32 %v1412, %v1414
        %v1419 = vadd.s32 %v1415, 1
        %v1420 = vsel %vm1418, %v1419, %v1415
        %v1421 = vadd.s32 %v1416, %v1420
        %v1422 = vadd.s32 %v1421, 536870912
        %v1423 = vshrl.u32 %v1422, 30
        %v1424 = vshll.u32 %v1423, 30
        %v1425 = vsub.s32 %v1421, %v1424
        %vm1426 = vcmp.lt.s32.totalorder %v1425, 0
        %v1427 = vsub.s32 0, %v1425
        %v1428 = vsel %vm1426, %v1427, %v1425
        %v1429 = vclz %v1428
        %v1430 = vsub.s32 %v1429, 2
        %vm1431 = vcmp.gt.s32.totalorder 0, %v1430
        %v1432 = vsel %vm1431, 0, %v1430
        %v1433 = vsub.s32 32, %v1432
        %v1434 = vshll.u32 %v1425, %v1432
        %v1435 = vshrl.u32 %v1417, %v1433
        %v1436 = vor.u32 %v1434, %v1435
        %v1437 = vsub.s32 4294967266, %v1432
        %v1438 = vadd.s32 %v1437, 127
        %v1439 = vshll.u32 %v1438, 23
        %v1440 = vor.u32 4788187, %v1439
        %v1441 = vand.u32 2147483647, %v1440
        %v1443 = vcvt.s32.f32 %v1436
        %v1444 = vmul.f32 %v1443, %v1441
        %v1445 = vxor.u32 %v1444, 2147483648
        %v1446 = vsel %vm1363, %v1445, %v1444
        %v1447 = vsub.s32 4, %v1423
        %v1448 = vsel %vm1363, %v1447, %v1423
        %v1449 = vsel %vm1362, %v1151, %v1446
        %v1450 = vsel %vm1362, 0, %v1448
        %v1451 = vcosq.f32.pop %v1449
        %v1452 = vsinq.f32.pop %v1449
        %vm1453 = vweird.f32 %v1151
        %v1454 = vadd.s32 %v1450, 3
        %v1455 = vand.u32 %v1454, 3
        %vm1456 = vcmp.lt.s32.totalorder %v1455, 2
        %vm1457 = vcmp.eq.s32.totalorder %v1455, 0
        %v1458 = vxor.u32 %v1452, 2147483648
        %v1459 = vsel %vm1457, %v1451, %v1458
        %vm1460 = vcmp.eq.s32.totalorder %v1455, 2
        %v1461 = vxor.u32 %v1451, 2147483648
        %v1462 = vsel %vm1460, %v1461, %v1452
        %v1463 = vsel %vm1456, %v1459, %v1462
        %v1464 = vsel %vm1453, nan, %v1463
        %v1465 = vand.u32 2147483647, %v1152
        %vm1466 = vcmp.le.f32.partialorder %v1465, 0.7853982
        %vm1467 = vcmp.lt.s32.totalorder %v1152, 0
        %v1468 = vand.u32 %v1152, 2139095040
        %v1469 = vshrl.u32 %v1468, 23
        %v1470 = vsub.s32 %v1469, 127
        %v1471 = vand.u32 2147483647, %v1152
        %v1472 = vand.u32 %v1471, 8388607
        %v1473 = vor.u32 %v1472, 8388608
        %v1474 = vsub.s32 0, %v1473
        %v1475 = vadd.s32 %v1470, 1
        %vm1476 = vcmp.gt.s32.totalorder %v1475, 0
        %v1477 = vsel %vm1476, %v1475, 0
        %v1478 = vshrl.u32 %v1477, 5
        %v1479 = vand.u32 %v1477, 31
        %v1480 = vsub.s32 32, %v1479
        %v1481 = vshrl.u32 683565275, %v1480
        %v1482 = vshll.u32 683565275, %v1479
        %v1483 = vshrl.u32 2475754826, %v1480
        %v1484 = vor.u32 %v1482, %v1483
        %v1485 = vshll.u32 2475754826, %v1479
        %v1486 = vshrl.u32 2131351028, %v1480
        %v1487 = vor.u32 %v1485, %v1486
        %v1488 = vshll.u32 2131351028, %v1479
        %v1489 = vshrl.u32 2102212464, %v1480
        %v1490 = vor.u32 %v1488, %v1489
        %v1491 = vshll.u32 2102212464, %v1479
        %v1492 = vshrl.u32 920167782, %v1480
        %v1493 = vor.u32 %v1491, %v1492
        %v1494 = vshll.u32 920167782, %v1479
        %v1495 = vshrl.u32 1326507024, %v1480
        %v1496 = vor.u32 %v1494, %v1495
        %vm1497 = vcmp.lt.s32.totalorder %v1478, 1
        %vm1498 = vcmp.lt.s32.totalorder %v1478, 2
        %vm1499 = vcmp.lt.s32.totalorder %v1478, 3
        %vm1500 = vcmp.lt.s32.totalorder %v1478, 4
        %v1501 = vsel %vm1497, %v1481, %v1484
        %v1502 = vsel %vm1500, %v1490, 2102212464
        %v1503 = vsel %vm1499, %v1487, %v1502
        %v1504 = vsel %vm1498, %v1501, %v1503
        %v1505 = vsel %vm1497, %v1484, %v1487
        %v1506 = vsel %vm1500, %v1493, 920167782
        %v1507 = vsel %vm1499, %v1490, %v1506
        %v1508 = vsel %vm1498, %v1505, %v1507
        %v1509 = vsel %vm1497, %v1487, %v1490
        %v1510 = vsel %vm1500, %v1496, 1326507024
        %v1511 = vsel %vm1499, %v1493, %v1510
        %v1512 = vsel %vm1498, %v1509, %v1511
        %v1513 = vshll.u32 %v1473, 8
        %v1514 = vmul.u32.u64.compose %v1513, %v1512
        %v1515 = vextract.low.u32 %v1514
        %v1516 = vextract.high.u32 %v1514
        %v1517 = vmul.u32.u64.compose %v1513, %v1508
        %v1518 = vextract.low.u32 %v1517
        %v1519 = vextract.high.u32 %v1517
        %v1520 = vmul.u32 %v1513, %v1504
        %v1521 = vadd.s32 %v1516, %v1518
        %vm1522 = vc.u32 %v1516, %v1518
        %v1523 = vadd.s32 %v1519, 1
        %v1524 = vsel %vm1522, %v1523, %v1519
        %v1525 = vadd.s32 %v1520, %v1524
        %v1526 = vadd.s32 %v1525, 536870912
        %v1527 = vshrl.u32 %v1526, 30
        %v1528 = vshll.u32 %v1527, 30
        %v1529 = vsub.s32 %v1525, %v1528
        %vm1530 = vcmp.lt.s32.totalorder %v1529, 0
        %v1531 = vsub.s32 0, %v1529
        %v1532 = vsel %vm1530, %v1531, %v1529
        %v1533 = vclz %v1532
        %v1534 = vsub.s32 %v1533, 2
        %vm1535 = vcmp.gt.s32.totalorder 0, %v1534
        %v1536 = vsel %vm1535, 0, %v1534
        %v1537 = vsub.s32 32, %v1536
        %v1538 = vshll.u32 %v1529, %v1536
        %v1539 = vshrl.u32 %v1521, %v1537
        %v1540 = vor.u32 %v1538, %v1539
        %v1541 = vsub.s32 4294967266, %v1536
        %v1542 = vadd.s32 %v1541, 127
        %v1543 = vshll.u32 %v1542, 23
        %v1544 = vor.u32 4788187, %v1543
        %v1545 = vand.u32 2147483647, %v1544
        %v1547 = vcvt.s32.f32 %v1540
        %v1548 = vmul.f32 %v1547, %v1545
        %v1549 = vxor.u32 %v1548, 2147483648
        %v1550 = vsel %vm1467, %v1549, %v1548
        %v1551 = vsub.s32 4, %v1527
        %v1552 = vsel %vm1467, %v1551, %v1527
        %v1553 = vsel %vm1466, %v1152, %v1550
        %v1554 = vsel %vm1466, 0, %v1552
        %v1555 = vcosq.f32.pop %v1553
        %v1556 = vsinq.f32.pop %v1553
        %vm1557 = vweird.f32 %v1152
        %v1558 = vadd.s32 %v1554, 3
        %v1559 = vand.u32 %v1558, 3
        %vm1560 = vcmp.lt.s32.totalorder %v1559, 2
        %vm1561 = vcmp.eq.s32.totalorder %v1559, 0
        %v1562 = vxor.u32 %v1556, 2147483648
        %v1563 = vsel %vm1561, %v1555, %v1562
        %vm1564 = vcmp.eq.s32.totalorder %v1559, 2
        %v1565 = vxor.u32 %v1555, 2147483648
        %v1566 = vsel %vm1564, %v1565, %v1556
        %v1567 = vsel %vm1560, %v1563, %v1566
        %v1568 = vsel %vm1557, nan, %v1567
        %1573 = vrot.lane.b32.xlu0 %v1256, 64
        %v1574 = vpop.permute.xlu0 %1573
        %1575 = vrot.lane.b32.xlu0 %v1360, 64
        %v1576 = vpop.permute.xlu0 %1575
        %1577 = vrot.lane.b32.xlu0 %v1464, 64
        %v1578 = vpop.permute.xlu0 %1577
        %1579 = vrot.lane.b32.xlu0 %v1568, 64
        %v1580 = vpop.permute.xlu0 %1579
        %v1585 = vmul.f32 %v1149, %v1574
        %v1586 = vmul.f32 %v1150, %v1576
        %v1587 = vmul.f32 %v1151, %v1578
        %v1588 = vmul.f32 %v1152, %v1580
        %v1589 = vld [vmem:[%s7] sm:$0xff]
        %v1590 = vld [vmem:[%s7 + $0x8] sm:$0xff]
        %v1591 = vld [vmem:[%s7 + $0x10] sm:$0xff]
        %v1592 = vld [vmem:[%s7 + $0x18] sm:$0xff]
        %v1593 = vld [vmem:[%s7 + $0x20] sm:$0xff]
        %v1594 = vld [vmem:[%s7 + $0x28] sm:$0xff]
        %v1595 = vld [vmem:[%s7 + $0x30] sm:$0xff]
        %v1596 = vld [vmem:[%s7 + $0x38] sm:$0xff]
        %v1597 = vld [vmem:[%s8] sm:$0x1]
        %v1599 = vlaneseq
        %v1600 = vshrl.u32 %v1599, 7
        %v1601 = vsub.s32 0, %v1600
        %v1602 = vrot.slane %v1597, %v1601
        %vm1604 = vcmask 523264
        %v1606 = vsel %vm1604, %v1585, 0
        %v1609 = vsel %vm1604, %v1586, 0
        %v1612 = vsel %vm1604, %v1587, 0
        %v1615 = vsel %vm1604, %v1588, 0
        %1617 = vmatprep.subr.mxu0 0.0
        %1618 = vmatpush1.msra.mxu0 %v1589
        %1619 = vmatprep.subr.mxu0 0.0
        %1620 = vmatpush1.msra.mxu0 %v1590
        %1621 = vmatprep.subr.mxu0 0.0
        %1622 = vmatpush1.msra.mxu0 %v1591
        %1623 = vmatprep.subr.mxu0 0.0
        %1624 = vmatpush1.msra.mxu0 %v1592
        %1625 = vmatprep.subr.mxu0 0.0
        %1626 = vmatpush1.msra.mxu0 %v1593
        %1627 = vmatprep.subr.mxu0 0.0
        %1628 = vmatpush1.msra.mxu0 %v1594
        %1629 = vmatprep.subr.mxu0 0.0
        %1630 = vmatpush1.msra.mxu0 %v1595
        %1631 = vmatprep.subr.mxu0 0.0
        %1632 = vmatpush1.msra.mxu0 %v1596
        %1633 = vmatprep.subr.mxu0 0.0
        %1634 = vmatpush1.msra.mxu0 0.0
        %1635 = vmatprep.subr.mxu0 0.0
        %1636 = vmatpush1.msra.mxu0 0.0
        %1637 = vmatprep.subr.mxu0 0.0
        %1638 = vmatpush1.msra.mxu0 0.0
        %1639 = vmatprep.subr.mxu0 0.0
        %1640 = vmatpush1.msra.mxu0 0.0
        %1641 = vmatprep.subr.mxu0 0.0
        %1642 = vmatpush1.msra.mxu0 0.0
        %1643 = vmatprep.subr.mxu0 0.0
        %1644 = vmatpush1.msra.mxu0 0.0
        %1645 = vmatprep.subr.mxu0 0.0
        %1646 = vmatpush1.msra.mxu0 0.0
        %1647 = vmatprep.subr.mxu0 0.0
        %1648 = vmatpush1.msra.mxu0 0.0
        %1649 = vmatprep.subr.mxu0 0.0
        %1650 = vmatpush1.msra.mxu0 0.0
        %1651 = vmatprep.subr.mxu0 0.0
        %1652 = vmatpush1.msra.mxu0 0.0
        %1653 = vmatprep.subr.mxu0 0.0
        %1654 = vmatpush1.msra.mxu0 0.0
        %1655 = vmatprep.subr.mxu0 0.0
        %1656 = vmatpush1.msra.mxu0 0.0
        %1657 = vmatprep.subr.mxu0 0.0
        %1658 = vmatpush1.msra.mxu0 0.0
        %1659 = vmatprep.subr.mxu0 0.0
        %1660 = vmatpush1.msra.mxu0 0.0
        %1661 = vmatprep.subr.mxu0 0.0
        %1662 = vmatpush1.msra.mxu0 0.0
        %1663 = vmatprep.subr.mxu0 0.0
        %1664 = vmatpush1.msra.mxu0 0.0
        %1665 = vmatprep.subr.mxu0 0.0
        %1666 = vmatpush1.msra.mxu0 0.0
        %1667 = vmatprep.subr.mxu0 0.0
        %1668 = vmatpush1.msra.mxu0 0.0
        %1669 = vmatprep.subr.mxu0 0.0
        %1670 = vmatpush1.msra.mxu0 0.0
        %1671 = vmatprep.subr.mxu0 0.0
        %1672 = vmatpush1.msra.mxu0 0.0
        %1673 = vmatprep.subr.mxu0 0.0
        %1674 = vmatpush1.msra.mxu0 0.0
        %1675 = vmatprep.subr.mxu0 0.0
        %1676 = vmatpush1.msra.mxu0 0.0
        %1677 = vmatprep.subr.mxu0 0.0
        %1678 = vmatpush1.msra.mxu0 0.0
        %1679 = vmatprep.subr.mxu0 0.0
        %1680 = vmatpush1.msra.mxu0 0.0
        %1681 = vmatprep.mubr.f32.mxu0 0.0
        %1682 = vmatmul.mubr.f32.gmra.mrb[0].mxu0 %v1606
        %v1683 = vpop.f32.mrb[0].mxu0
        %v1684 = vadd.f32 %v1602, %v1683
        %v1685 = vpop.f32.mrb[0].mxu0
        %1686 = vmatprep.mubr.f32.mxu0 0.0
        %1687 = vmatmul.mubr.f32.gmra.mrb[0].mxu0 %v1609
        %v1688 = vpop.f32.mrb[0].mxu0
        %v1689 = vadd.f32 %v1602, %v1688
        %v1690 = vpop.f32.mrb[0].mxu0
        %1691 = vmatprep.mubr.f32.mxu0 0.0
        %1692 = vmatmul.mubr.f32.gmra.mrb[0].mxu0 %v1612
        %v1693 = vpop.f32.mrb[0].mxu0
        %v1694 = vadd.f32 %v1602, %v1693
        %v1695 = vpop.f32.mrb[0].mxu0
        %1696 = vmatprep.mubr.f32.mxu0 0.0
        %1697 = vmatmul.mubr.f32.gmra.mrb[0].mxu0 %v1615
        %v1698 = vpop.f32.mrb[0].mxu0
        %v1699 = vadd.f32 %v1602, %v1698
        %v1700 = vpop.f32.mrb[0].mxu0
        %1701 = vdwg.mxu0
        %v1702 = vadd.f32 %v1684, %v378
        %v1703 = vadd.f32 %v1689, %v379
        %v1704 = vadd.f32 %v1694, %v380
        %v1705 = vadd.f32 %v1699, %v381
        %1706 = vst [vmem:[%s370] sm:$0xff] %v1702
        %1707 = vst [vmem:[%s370 + $0x8] sm:$0xff] %v1703
        %1708 = vst [vmem:[%s370 + $0x10] sm:$0xff] %v1704
        %1709 = vst [vmem:[%s370 + $0x18] sm:$0xff] %v1705
        %s1710 = sand.u32 %s227, 1
        %s1711 = scalar_lea.sflag [#allocation4], %s1710
        %s1712 = sand.u32 %s227, 1
        %s1713 = smul.addr %s1712, 32
        %s1714 = scalar_lea.vmem [#allocation8], %s1713
        // Predicated region
        $region69: #{tpu_custom_call.1} parent=55 // pred_check
          %p1715 = pneg %p237
        $region70: #{tpu_custom_call.1} parent=55 // pred_check_branch
          %1717 = sbr.rel (%p1715) target = $region72
        $region71: #{tpu_custom_call.1} parent=55 // pred_region
          %s1718 = smul.u32 4, %s25
          %s1720 = ssub.s32 512, 512
          %1721 = vsyncadd %s1711, %s1720
          %s1722 = smul.addr %s1718, 128
          %s1723 = scalar_lea.hbm %s9, %s1722
          %s1724 = sshll.u32 %s1714, 4
          %s1725 = int_to_ptr.vmem [resolvable:$true] %s1724
          %1730 = dma.vmem_to_hbm [thread:$0]  %s1725, 512, %s1723, %s1711, 128, 128, 8
        $region72: #{tpu_custom_call.1} parent=55 // pred_fallthru
          _
      $region56: #{tpu_custom_call.1} parent=5 // pred_fallthru
        _
      %p1731 = scmp.le.s32.totalorder 2, %s20
      // Predicated region
      $region73: #{tpu_custom_call.1} parent=5 // pred_check
        %p1732 = pneg %p1731
      $region74: #{tpu_custom_call.1} parent=5 // pred_check_branch
        %1734 = sbr.rel (%p1732) target = $region76
      $region75: #{tpu_custom_call.1} parent=5 // pred_region
        %s1735 = ssub.s32 %s20, 2
        // Predicated region
        $region77: #{tpu_custom_call.1} parent=75 // pred_check
          %p1736 = pneg %p243
        $region78: #{tpu_custom_call.1} parent=75 // pred_check_branch
          %1738 = sbr.rel (%p1736) target = $region80
        $region79: #{tpu_custom_call.1} parent=75 // pred_region
          %s1739 = sand.u32 %s228, 1
          %s1740 = scalar_lea.sflag [#allocation4], %s1739
          %s1741 = sand.u32 %s228, 1
          %s1742 = smul.addr %s1741, 32
          %s1743 = scalar_lea.vmem [#allocation8], %s1742
          %1744 = dma.done %s1740, 512
        $region80: #{tpu_custom_call.1} parent=75 // pred_fallthru
          _
      $region76: #{tpu_custom_call.1} parent=5 // pred_fallthru
        _
    $region6: #{tpu_custom_call.1} parent=1 // loop_footer
      %s24 = sadd.s32 1, %s20
    $region7: #{tpu_custom_call.1} parent=1 // loop_footer_branch
      %19 = sbr.rel target = $region3
    $region8: #{tpu_custom_call.1} parent=1 // loop_exit
      _
    %1745 = vsyncpa [#allocation3], 1
    %s1746 = scalar_lea.sflag [#allocation3], 1
    %1747 = vsyncpa %s1746, 1
    %1748 = vsyncpa [#allocation6], 1
    %1749 = vsyncpa [#allocation4], 1
    %s1750 = scalar_lea.sflag [#allocation4], 1
    %1751 = vsyncpa %s1750, 1

</llo_original>
